<compile_context>
chip_gen: v6e
topology: v6e:2x2x1
jax: 0.10.0
libtpu: 0.0.40
codegen_flags: <defaults>
</compile_context>

<pallas_src>
import numpy as np
import jax
import jax.numpy as jnp
from jax.experimental import pallas as pl
from jax.experimental.pallas import tpu as pltpu


def _rup(x, m):
    return ((x + m - 1) // m) * m


# ----------------------------------------------------------------------------
# Module logic (mirrors DeconvBottleneck.__init__ exactly)
# ----------------------------------------------------------------------------
def build_layer_specs(size, src_len, conv_list):
    conv_list = list(conv_list)
    conv_list.insert(0, src_len + 1)
    specs = []
    in_d = 64
    for i in range(3):
        L_in = conv_list[3 - i]
        L_out = conv_list[3 - (i + 1)]
        out_d = (size - in_d) // 4 + in_d
        stride = 2
        kernel_size = L_out - 1 - 2 * (L_in - 1) + 1
        if i == 2:
            out_d = size
        specs.append(dict(in_d=in_d, out_d=out_d, k=kernel_size,
                          stride=stride, L_in=L_in, L_out=L_out))
        in_d = out_d
    return specs


def init_params(specs, key):
    """PyTorch-style uniform +-1/sqrt(fan_in) init; weight layout (C_in, C_out, K)."""
    params = []
    for s in specs:
        key, kw, kb = jax.random.split(key, 3)
        bound = 1.0 / np.sqrt(s["in_d"] * s["k"])
        W = jax.random.uniform(kw, (s["in_d"], s["out_d"], s["k"]),
                               jnp.float32, -bound, bound)
        b = jax.random.uniform(kb, (s["out_d"],), jnp.float32, -bound, bound)
        params.append((W, b))
    return params


# ----------------------------------------------------------------------------
# One-time packing (hoisted out of the forward path):
#   compact per-tap GEMM weight + bias row + stride-2 scatter matrices,
#   all zero-padded to (8, 128)-aligned shapes.
# ----------------------------------------------------------------------------
def pack_params(specs, params):
    c_pad = _rup(max([s["in_d"] for s in specs] + [s["out_d"] for s in specs]), 128)
    packed = []
    for s, (W, b) in zip(specs, params):
        K, stride = s["k"], s["stride"]
        L_in_p, L_out_p = _rup(s["L_in"], 8), _rup(s["L_out"], 8)

        Wnp = np.asarray(W, np.float32)            # (C_in, C_out, K)
        bnp = np.asarray(b, np.float32)

        # Wp[ci, k*c_pad + co] = W[ci, co, k]   (taps packed along 128-aligned lanes)
        Wp = np.zeros((c_pad, K * c_pad), np.float32)
        for k in range(K):
            Wp[:s["in_d"], k * c_pad:k * c_pad + s["out_d"]] = Wnp[:, :, k]

        bp = np.zeros((1, c_pad), np.float32)
        bp[0, :s["out_d"]] = bnp

        # S[k, i*stride + k, i] = 1 : overlap-add of tap k into output positions
        Sp = np.zeros((K, L_out_p, L_in_p), np.float32)
        for k in range(K):
            for i in range(s["L_in"]):
                Sp[k, i * stride + k, i] = 1.0

        packed.append(dict(W=jnp.asarray(Wp), b=jnp.asarray(bp), S=jnp.asarray(Sp),
                           K=K, L_in_p=L_in_p, L_out_p=L_out_p))
    return packed, c_pad


# ----------------------------------------------------------------------------
# Fused Pallas kernel: 3 x (compact GEMM -> stride-2 overlap-add -> bias -> ReLU)
# one grid program per batch element, everything stays on-chip.
# ----------------------------------------------------------------------------
def make_kernel(packed, c_pad):
    n_layers = len(packed)
    Ks = [p["K"] for p in packed]
    Lops = [p["L_out_p"] for p in packed]

    def kernel(x_ref, *rest):
        o_ref = rest[-1]
        h = x_ref[0]                                         # (L0_pad, c_pad) f32
        for l in range(n_layers):                            # static unrolled
            w_ref, b_ref, s_ref = rest[3 * l], rest[3 * l + 1], rest[3 * l + 2]
            K, L_out_p = Ks[l], Lops[l]
            # channel contraction for all K taps at once (compact weight)
            P = jnp.dot(h, w_ref[...], preferred_element_type=jnp.float32)
            # stride-2 overlap-add via tiny 0/1 scatter GEMMs (one per tap)
            y = jnp.zeros((L_out_p, c_pad), jnp.float32)
            for k in range(K):
                y = y + jnp.dot(s_ref[k], P[:, k * c_pad:(k + 1) * c_pad],
                                preferred_element_type=jnp.float32)
            h = jnp.maximum(y + b_ref[...], 0.0)             # bias + ReLU
        o_ref[0] = h.astype(o_ref.dtype)

    return kernel


def deconv_bottleneck_forward(x_ncl, specs, packed, c_pad):
    """x_ncl: (N, 64, conv_list[-1]) f32 -> (N, size, src_len + 1) f32."""
    N = x_ncl.shape[0]
    L_in0 = packed[0]["L_in_p"]
    L_out_last = packed[-1]["L_out_p"]
    L0_r, C0_r = specs[0]["L_in"], specs[0]["in_d"]
    L3_r, C3_r = specs[-1]["L_out"], specs[-1]["out_d"]

    # Layout plumbing (glue): NCL -> NLC, zero-pad to (8,128)-aligned tiles.
    x = jnp.transpose(x_ncl, (0, 2, 1))
    x = jnp.pad(x, ((0, 0), (0, L_in0 - L0_r), (0, c_pad - C0_r)))

    in_specs = [pl.BlockSpec((1, L_in0, c_pad), lambda n: (n, 0, 0))]
    args = [x]
    for p in packed:
        in_specs += [
            pl.BlockSpec(p["W"].shape, lambda n: (0, 0)),      # weights stay VMEM-resident
            pl.BlockSpec(p["b"].shape, lambda n: (0, 0)),
            pl.BlockSpec(p["S"].shape, lambda n: (0, 0, 0)),
        ]
        args += [p["W"], p["b"], p["S"]]

    out = pl.pallas_call(
        make_kernel(packed, c_pad),
        out_shape=jax.ShapeDtypeStruct((N, L_out_last, c_pad), jnp.float32),
        grid=(N,),
        in_specs=in_specs,
        out_specs=pl.BlockSpec((1, L_out_last, c_pad), lambda n: (n, 0, 0)),
        compiler_params=pltpu.CompilerParams(
            dimension_semantics=("parallel",)),                # 2 TCs on v7x
    )(*args)

    # Slice alignment pad off and return to the PyTorch NCL layout.
    return jnp.transpose(out[:, :L3_r, :C3_r], (0, 2, 1))


# ----------------------------------------------------------------------------
# Naive numpy reference (direct ConvTranspose1d semantics) for verification
# ----------------------------------------------------------------------------
def reference_forward(x, specs, params):
    x = np.asarray(x, np.float32)
    for s, (W, b) in zip(specs, params):
        W = np.asarray(W)
        b = np.asarray(b)
        N, C_in, L_in = x.shape
        K, stride = s["k"], s["stride"]
        L_out = (L_in - 1) * stride + K
        y = np.zeros((N, s["out_d"], L_out), np.float32)
        for n in range(N):
            for ci in range(C_in):
                for i in range(L_in):
                    for k in range(K):
                        y[n, :, i * stride + k] += x[n, ci, i] * W[ci, :, k]
        y += b[None, :, None]
        x = np.maximum(y, 0.0)
    return x


# ----------------------------------------------------------------------------
if __name__ == "__main__":
    # Small, self-consistent configuration:
    #   size=32 (d_model), src_len=22, conv_list=[11, 5, 2]
    #   -> lengths 2 -> 5 -> 11 -> 23, kernels 3/3/3 (stride 2),
    #      channels 64 -> 56 -> 50 -> 32
    size, src_len = 32, 22
    conv_list = [11, 5, 2]

    specs = build_layer_specs(size, src_len, conv_list)
    params = init_params(specs, jax.random.PRNGKey(42))
    packed, c_pad = pack_params(specs, params)          # hoisted: one-time packing

    x = jax.random.normal(jax.random.PRNGKey(0), (2, 64, conv_list[-1]), jnp.float32)

    y = deconv_bottleneck_forward(x, specs, packed, c_pad)
    y = jax.block_until_ready(y)
    assert y.shape == (2, size, src_len + 1), y.shape

    y_ref = reference_forward(x, specs, params)
    np.testing.assert_allclose(np.asarray(y), y_ref, rtol=2e-4, atol=2e-4)

    print("KERNEL_OK")
</pallas_src>

<mosaic_0001>
module attributes {stable_mosaic.version = 11 : i64} {
  func.func @kernel(%arg0: i32, %arg1: memref<1x8x128xf32, #tpu.memory_space<vmem>>, %arg2: memref<128x384xf32, #tpu.memory_space<vmem>>, %arg3: memref<1x128xf32, #tpu.memory_space<vmem>>, %arg4: memref<3x8x8xf32, #tpu.memory_space<vmem>>, %arg5: memref<128x384xf32, #tpu.memory_space<vmem>>, %arg6: memref<1x128xf32, #tpu.memory_space<vmem>>, %arg7: memref<3x16x8xf32, #tpu.memory_space<vmem>>, %arg8: memref<128x384xf32, #tpu.memory_space<vmem>>, %arg9: memref<1x128xf32, #tpu.memory_space<vmem>>, %arg10: memref<3x24x16xf32, #tpu.memory_space<vmem>>, %arg11: memref<1x24x128xf32, #tpu.memory_space<vmem>>) attributes {dimension_semantics = [#tpu.dimension_semantics<parallel>], iteration_bounds = array<i64: 2>, scalar_prefetch = 0 : i64, scratch_operands = 0 : i64, tpu.core_type = #tpu.core_type<tc>, window_params = [{transform_indices = @transform_0, window_bounds = array<i64: 1, 8, 128>}, {pipeline_mode = #tpu.pipeline_mode<synchronous>, transform_indices = @transform_1, window_bounds = array<i64: 128, 384>}, {pipeline_mode = #tpu.pipeline_mode<synchronous>, transform_indices = @transform_2, window_bounds = array<i64: 1, 128>}, {pipeline_mode = #tpu.pipeline_mode<synchronous>, transform_indices = @transform_3, window_bounds = array<i64: 3, 8, 8>}, {pipeline_mode = #tpu.pipeline_mode<synchronous>, transform_indices = @transform_4, window_bounds = array<i64: 128, 384>}, {pipeline_mode = #tpu.pipeline_mode<synchronous>, transform_indices = @transform_5, window_bounds = array<i64: 1, 128>}, {pipeline_mode = #tpu.pipeline_mode<synchronous>, transform_indices = @transform_6, window_bounds = array<i64: 3, 16, 8>}, {pipeline_mode = #tpu.pipeline_mode<synchronous>, transform_indices = @transform_7, window_bounds = array<i64: 128, 384>}, {pipeline_mode = #tpu.pipeline_mode<synchronous>, transform_indices = @transform_8, window_bounds = array<i64: 1, 128>}, {pipeline_mode = #tpu.pipeline_mode<synchronous>, transform_indices = @transform_9, window_bounds = array<i64: 3, 24, 16>}, {transform_indices = @transform_10, window_bounds = array<i64: 1, 24, 128>}]} {
    %c0 = arith.constant 0 : index
    %c0_0 = arith.constant 0 : index
    %c0_1 = arith.constant 0 : index
    %0 = vector.load %arg1[%c0, %c0_0, %c0_1] : memref<1x8x128xf32, #tpu.memory_space<vmem>>, vector<1x8x128xf32>
    %1 = vector.shape_cast %0 : vector<1x8x128xf32> to vector<8x128xf32>
    %c0_2 = arith.constant 0 : index
    %c0_3 = arith.constant 0 : index
    %2 = vector.load %arg2[%c0_2, %c0_3] : memref<128x384xf32, #tpu.memory_space<vmem>>, vector<128x384xf32>
    %cst = arith.constant dense<0.000000e+00> : vector<8x384xf32>
    %3 = tpu.matmul %1, %2, %cst {dimension_numbers = #tpu.dot_dimension_numbers<[1], [0], [0], [1], [0, 0, 1, 1], [], []>} : vector<8x128xf32>, vector<128x384xf32>, vector<8x384xf32> -> vector<8x384xf32>
    %cst_4 = arith.constant 0.000000e+00 : f32
    %4 = vector.broadcast %cst_4 : f32 to vector<8x128xf32>
    %c0_5 = arith.constant 0 : index
    %c0_6 = arith.constant 0 : index
    %c0_7 = arith.constant 0 : index
    %5 = vector.load %arg4[%c0_5, %c0_6, %c0_7] : memref<3x8x8xf32, #tpu.memory_space<vmem>>, vector<1x8x8xf32>
    %6 = vector.shape_cast %5 : vector<1x8x8xf32> to vector<8x8xf32>
    %7 = vector.extract_strided_slice %3 {offsets = [0, 0], sizes = [8, 128], strides = [1, 1]} : vector<8x384xf32> to vector<8x128xf32>
    %cst_8 = arith.constant dense<0.000000e+00> : vector<8x128xf32>
    %8 = tpu.matmul %6, %7, %cst_8 {dimension_numbers = #tpu.dot_dimension_numbers<[1], [0], [0], [1], [0, 0, 1, 1], [], []>} : vector<8x8xf32>, vector<8x128xf32>, vector<8x128xf32> -> vector<8x128xf32>
    %9 = arith.addf %4, %8 : vector<8x128xf32>
    %c1 = arith.constant 1 : index
    %c0_9 = arith.constant 0 : index
    %c0_10 = arith.constant 0 : index
    %10 = vector.load %arg4[%c1, %c0_9, %c0_10] : memref<3x8x8xf32, #tpu.memory_space<vmem>>, vector<1x8x8xf32>
    %11 = vector.shape_cast %10 : vector<1x8x8xf32> to vector<8x8xf32>
    %12 = vector.extract_strided_slice %3 {offsets = [0, 128], sizes = [8, 128], strides = [1, 1]} : vector<8x384xf32> to vector<8x128xf32>
    %cst_11 = arith.constant dense<0.000000e+00> : vector<8x128xf32>
    %13 = tpu.matmul %11, %12, %cst_11 {dimension_numbers = #tpu.dot_dimension_numbers<[1], [0], [0], [1], [0, 0, 1, 1], [], []>} : vector<8x8xf32>, vector<8x128xf32>, vector<8x128xf32> -> vector<8x128xf32>
    %14 = arith.addf %9, %13 : vector<8x128xf32>
    %c2 = arith.constant 2 : index
    %c0_12 = arith.constant 0 : index
    %c0_13 = arith.constant 0 : index
    %15 = vector.load %arg4[%c2, %c0_12, %c0_13] : memref<3x8x8xf32, #tpu.memory_space<vmem>>, vector<1x8x8xf32>
    %16 = vector.shape_cast %15 : vector<1x8x8xf32> to vector<8x8xf32>
    %17 = vector.extract_strided_slice %3 {offsets = [0, 256], sizes = [8, 128], strides = [1, 1]} : vector<8x384xf32> to vector<8x128xf32>
    %cst_14 = arith.constant dense<0.000000e+00> : vector<8x128xf32>
    %18 = tpu.matmul %16, %17, %cst_14 {dimension_numbers = #tpu.dot_dimension_numbers<[1], [0], [0], [1], [0, 0, 1, 1], [], []>} : vector<8x8xf32>, vector<8x128xf32>, vector<8x128xf32> -> vector<8x128xf32>
    %19 = arith.addf %14, %18 : vector<8x128xf32>
    %c0_15 = arith.constant 0 : index
    %c0_16 = arith.constant 0 : index
    %20 = vector.load %arg3[%c0_15, %c0_16] : memref<1x128xf32, #tpu.memory_space<vmem>>, vector<1x128xf32>
    %21 = vector.broadcast %20 : vector<1x128xf32> to vector<8x128xf32>
    %22 = arith.addf %19, %21 : vector<8x128xf32>
    %cst_17 = arith.constant 0.000000e+00 : f32
    %23 = vector.broadcast %cst_17 : f32 to vector<8x128xf32>
    %24 = arith.maximumf %22, %23 : vector<8x128xf32>
    %c0_18 = arith.constant 0 : index
    %c0_19 = arith.constant 0 : index
    %25 = vector.load %arg5[%c0_18, %c0_19] : memref<128x384xf32, #tpu.memory_space<vmem>>, vector<128x384xf32>
    %cst_20 = arith.constant dense<0.000000e+00> : vector<8x384xf32>
    %26 = tpu.matmul %24, %25, %cst_20 {dimension_numbers = #tpu.dot_dimension_numbers<[1], [0], [0], [1], [0, 0, 1, 1], [], []>} : vector<8x128xf32>, vector<128x384xf32>, vector<8x384xf32> -> vector<8x384xf32>
    %cst_21 = arith.constant 0.000000e+00 : f32
    %27 = vector.broadcast %cst_21 : f32 to vector<16x128xf32>
    %c0_22 = arith.constant 0 : index
    %c0_23 = arith.constant 0 : index
    %c0_24 = arith.constant 0 : index
    %28 = vector.load %arg7[%c0_22, %c0_23, %c0_24] : memref<3x16x8xf32, #tpu.memory_space<vmem>>, vector<1x16x8xf32>
    %29 = vector.shape_cast %28 : vector<1x16x8xf32> to vector<16x8xf32>
    %30 = vector.extract_strided_slice %26 {offsets = [0, 0], sizes = [8, 128], strides = [1, 1]} : vector<8x384xf32> to vector<8x128xf32>
    %cst_25 = arith.constant dense<0.000000e+00> : vector<16x128xf32>
    %31 = tpu.matmul %29, %30, %cst_25 {dimension_numbers = #tpu.dot_dimension_numbers<[1], [0], [0], [1], [0, 0, 1, 1], [], []>} : vector<16x8xf32>, vector<8x128xf32>, vector<16x128xf32> -> vector<16x128xf32>
    %32 = arith.addf %27, %31 : vector<16x128xf32>
    %c1_26 = arith.constant 1 : index
    %c0_27 = arith.constant 0 : index
    %c0_28 = arith.constant 0 : index
    %33 = vector.load %arg7[%c1_26, %c0_27, %c0_28] : memref<3x16x8xf32, #tpu.memory_space<vmem>>, vector<1x16x8xf32>
    %34 = vector.shape_cast %33 : vector<1x16x8xf32> to vector<16x8xf32>
    %35 = vector.extract_strided_slice %26 {offsets = [0, 128], sizes = [8, 128], strides = [1, 1]} : vector<8x384xf32> to vector<8x128xf32>
    %cst_29 = arith.constant dense<0.000000e+00> : vector<16x128xf32>
    %36 = tpu.matmul %34, %35, %cst_29 {dimension_numbers = #tpu.dot_dimension_numbers<[1], [0], [0], [1], [0, 0, 1, 1], [], []>} : vector<16x8xf32>, vector<8x128xf32>, vector<16x128xf32> -> vector<16x128xf32>
    %37 = arith.addf %32, %36 : vector<16x128xf32>
    %c2_30 = arith.constant 2 : index
    %c0_31 = arith.constant 0 : index
    %c0_32 = arith.constant 0 : index
    %38 = vector.load %arg7[%c2_30, %c0_31, %c0_32] : memref<3x16x8xf32, #tpu.memory_space<vmem>>, vector<1x16x8xf32>
    %39 = vector.shape_cast %38 : vector<1x16x8xf32> to vector<16x8xf32>
    %40 = vector.extract_strided_slice %26 {offsets = [0, 256], sizes = [8, 128], strides = [1, 1]} : vector<8x384xf32> to vector<8x128xf32>
    %cst_33 = arith.constant dense<0.000000e+00> : vector<16x128xf32>
    %41 = tpu.matmul %39, %40, %cst_33 {dimension_numbers = #tpu.dot_dimension_numbers<[1], [0], [0], [1], [0, 0, 1, 1], [], []>} : vector<16x8xf32>, vector<8x128xf32>, vector<16x128xf32> -> vector<16x128xf32>
    %42 = arith.addf %37, %41 : vector<16x128xf32>
    %c0_34 = arith.constant 0 : index
    %c0_35 = arith.constant 0 : index
    %43 = vector.load %arg6[%c0_34, %c0_35] : memref<1x128xf32, #tpu.memory_space<vmem>>, vector<1x128xf32>
    %44 = vector.broadcast %43 : vector<1x128xf32> to vector<16x128xf32>
    %45 = arith.addf %42, %44 : vector<16x128xf32>
    %cst_36 = arith.constant 0.000000e+00 : f32
    %46 = vector.broadcast %cst_36 : f32 to vector<16x128xf32>
    %47 = arith.maximumf %45, %46 : vector<16x128xf32>
    %c0_37 = arith.constant 0 : index
    %c0_38 = arith.constant 0 : index
    %48 = vector.load %arg8[%c0_37, %c0_38] : memref<128x384xf32, #tpu.memory_space<vmem>>, vector<128x384xf32>
    %cst_39 = arith.constant dense<0.000000e+00> : vector<16x384xf32>
    %49 = tpu.matmul %47, %48, %cst_39 {dimension_numbers = #tpu.dot_dimension_numbers<[1], [0], [0], [1], [0, 0, 1, 1], [], []>} : vector<16x128xf32>, vector<128x384xf32>, vector<16x384xf32> -> vector<16x384xf32>
    %cst_40 = arith.constant 0.000000e+00 : f32
    %50 = vector.broadcast %cst_40 : f32 to vector<24x128xf32>
    %c0_41 = arith.constant 0 : index
    %c0_42 = arith.constant 0 : index
    %c0_43 = arith.constant 0 : index
    %51 = vector.load %arg10[%c0_41, %c0_42, %c0_43] : memref<3x24x16xf32, #tpu.memory_space<vmem>>, vector<1x24x16xf32>
    %52 = vector.shape_cast %51 : vector<1x24x16xf32> to vector<24x16xf32>
    %53 = vector.extract_strided_slice %49 {offsets = [0, 0], sizes = [16, 128], strides = [1, 1]} : vector<16x384xf32> to vector<16x128xf32>
    %cst_44 = arith.constant dense<0.000000e+00> : vector<24x128xf32>
    %54 = tpu.matmul %52, %53, %cst_44 {dimension_numbers = #tpu.dot_dimension_numbers<[1], [0], [0], [1], [0, 0, 1, 1], [], []>} : vector<24x16xf32>, vector<16x128xf32>, vector<24x128xf32> -> vector<24x128xf32>
    %55 = arith.addf %50, %54 : vector<24x128xf32>
    %c1_45 = arith.constant 1 : index
    %c0_46 = arith.constant 0 : index
    %c0_47 = arith.constant 0 : index
    %56 = vector.load %arg10[%c1_45, %c0_46, %c0_47] : memref<3x24x16xf32, #tpu.memory_space<vmem>>, vector<1x24x16xf32>
    %57 = vector.shape_cast %56 : vector<1x24x16xf32> to vector<24x16xf32>
    %58 = vector.extract_strided_slice %49 {offsets = [0, 128], sizes = [16, 128], strides = [1, 1]} : vector<16x384xf32> to vector<16x128xf32>
    %cst_48 = arith.constant dense<0.000000e+00> : vector<24x128xf32>
    %59 = tpu.matmul %57, %58, %cst_48 {dimension_numbers = #tpu.dot_dimension_numbers<[1], [0], [0], [1], [0, 0, 1, 1], [], []>} : vector<24x16xf32>, vector<16x128xf32>, vector<24x128xf32> -> vector<24x128xf32>
    %60 = arith.addf %55, %59 : vector<24x128xf32>
    %c2_49 = arith.constant 2 : index
    %c0_50 = arith.constant 0 : index
    %c0_51 = arith.constant 0 : index
    %61 = vector.load %arg10[%c2_49, %c0_50, %c0_51] : memref<3x24x16xf32, #tpu.memory_space<vmem>>, vector<1x24x16xf32>
    %62 = vector.shape_cast %61 : vector<1x24x16xf32> to vector<24x16xf32>
    %63 = vector.extract_strided_slice %49 {offsets = [0, 256], sizes = [16, 128], strides = [1, 1]} : vector<16x384xf32> to vector<16x128xf32>
    %cst_52 = arith.constant dense<0.000000e+00> : vector<24x128xf32>
    %64 = tpu.matmul %62, %63, %cst_52 {dimension_numbers = #tpu.dot_dimension_numbers<[1], [0], [0], [1], [0, 0, 1, 1], [], []>} : vector<24x16xf32>, vector<16x128xf32>, vector<24x128xf32> -> vector<24x128xf32>
    %65 = arith.addf %60, %64 : vector<24x128xf32>
    %c0_53 = arith.constant 0 : index
    %c0_54 = arith.constant 0 : index
    %66 = vector.load %arg9[%c0_53, %c0_54] : memref<1x128xf32, #tpu.memory_space<vmem>>, vector<1x128xf32>
    %67 = vector.broadcast %66 : vector<1x128xf32> to vector<24x128xf32>
    %68 = arith.addf %65, %67 : vector<24x128xf32>
    %cst_55 = arith.constant 0.000000e+00 : f32
    %69 = vector.broadcast %cst_55 : f32 to vector<24x128xf32>
    %70 = arith.maximumf %68, %69 : vector<24x128xf32>
    %c0_56 = arith.constant 0 : index
    %c0_57 = arith.constant 0 : index
    %c0_58 = arith.constant 0 : index
    %71 = vector.load %arg11[%c0_56, %c0_57, %c0_58] : memref<1x24x128xf32, #tpu.memory_space<vmem>>, vector<1x24x128xf32>
    %72 = vector.shape_cast %71 : vector<1x24x128xf32> to vector<24x128xf32>
    %73 = vector.shape_cast %70 : vector<24x128xf32> to vector<1x24x128xf32>
    tpu.vector_store %arg11[%c0_56, %c0_57, %c0_58], %73 {strides = array<i32>} : memref<1x24x128xf32, #tpu.memory_space<vmem>>, vector<1x24x128xf32>,
    return
  }
  func.func @transform_0(%arg0: i32) -> (i32, i32, i32) {
    %c0_i32 = arith.constant 0 : i32
    %c0_i32_0 = arith.constant 0 : i32
    %c0_i32_1 = arith.constant 0 : i32
    return %arg0, %c0_i32, %c0_i32_0 : i32, i32, i32
  }
  func.func @transform_1(%arg0: i32) -> (i32, i32) {
    %c0_i32 = arith.constant 0 : i32
    %c0_i32_0 = arith.constant 0 : i32
    %c0_i32_1 = arith.constant 0 : i32
    return %c0_i32, %c0_i32_0 : i32, i32
  }
  func.func @transform_2(%arg0: i32) -> (i32, i32) {
    %c0_i32 = arith.constant 0 : i32
    %c0_i32_0 = arith.constant 0 : i32
    %c0_i32_1 = arith.constant 0 : i32
    return %c0_i32, %c0_i32_0 : i32, i32
  }
  func.func @transform_3(%arg0: i32) -> (i32, i32, i32) {
    %c0_i32 = arith.constant 0 : i32
    %c0_i32_0 = arith.constant 0 : i32
    %c0_i32_1 = arith.constant 0 : i32
    %c0_i32_2 = arith.constant 0 : i32
    return %c0_i32, %c0_i32_0, %c0_i32_1 : i32, i32, i32
  }
  func.func @transform_4(%arg0: i32) -> (i32, i32) {
    %c0_i32 = arith.constant 0 : i32
    %c0_i32_0 = arith.constant 0 : i32
    %c0_i32_1 = arith.constant 0 : i32
    return %c0_i32, %c0_i32_0 : i32, i32
  }
  func.func @transform_5(%arg0: i32) -> (i32, i32) {
    %c0_i32 = arith.constant 0 : i32
    %c0_i32_0 = arith.constant 0 : i32
    %c0_i32_1 = arith.constant 0 : i32
    return %c0_i32, %c0_i32_0 : i32, i32
  }
  func.func @transform_6(%arg0: i32) -> (i32, i32, i32) {
    %c0_i32 = arith.constant 0 : i32
    %c0_i32_0 = arith.constant 0 : i32
    %c0_i32_1 = arith.constant 0 : i32
    %c0_i32_2 = arith.constant 0 : i32
    return %c0_i32, %c0_i32_0, %c0_i32_1 : i32, i32, i32
  }
  func.func @transform_7(%arg0: i32) -> (i32, i32) {
    %c0_i32 = arith.constant 0 : i32
    %c0_i32_0 = arith.constant 0 : i32
    %c0_i32_1 = arith.constant 0 : i32
    return %c0_i32, %c0_i32_0 : i32, i32
  }
  func.func @transform_8(%arg0: i32) -> (i32, i32) {
    %c0_i32 = arith.constant 0 : i32
    %c0_i32_0 = arith.constant 0 : i32
    %c0_i32_1 = arith.constant 0 : i32
    return %c0_i32, %c0_i32_0 : i32, i32
  }
  func.func @transform_9(%arg0: i32) -> (i32, i32, i32) {
    %c0_i32 = arith.constant 0 : i32
    %c0_i32_0 = arith.constant 0 : i32
    %c0_i32_1 = arith.constant 0 : i32
    %c0_i32_2 = arith.constant 0 : i32
    return %c0_i32, %c0_i32_0, %c0_i32_1 : i32, i32, i32
  }
  func.func @transform_10(%arg0: i32) -> (i32, i32, i32) {
    %c0_i32 = arith.constant 0 : i32
    %c0_i32_0 = arith.constant 0 : i32
    %c0_i32_1 = arith.constant 0 : i32
    return %arg0, %c0_i32, %c0_i32_0 : i32, i32, i32
  }
}

</mosaic_0001>

<llo_original>
// kernel: tpu_custom_call.1
$region0: #{tpu_custom_call.1}
  #allocation0 [shape = 'u32[]', space=smem, size = 0x4, offset = 0x4, fixed_abs, tag = 'smem constant byte address 0x4 - core index']
  #allocation1 [shape = 'u32[144,128]{1,0:T(1,128)}', space=vmem, size = 0x12000, scoped, tag = 'internal scratch']
  %s0 = inlined_call_operand.vmem [shape: f32[2,8,128], index: 0, kind: input, shape index: {}]
  %s1 = inlined_call_operand.hbm [shape: f32[128,384], index: 1, kind: input, shape index: {}]
  %s2 = inlined_call_operand.vmem [shape: f32[1,128], index: 2, kind: input, shape index: {}]
  %s3 = inlined_call_operand.vmem [shape: f32[3,8,8], index: 3, kind: input, shape index: {}]
  %s4 = inlined_call_operand.hbm [shape: f32[128,384], index: 4, kind: input, shape index: {}]
  %s5 = inlined_call_operand.vmem [shape: f32[1,128], index: 5, kind: input, shape index: {}]
  %s6 = inlined_call_operand.vmem [shape: f32[3,16,8], index: 6, kind: input, shape index: {}]
  %s7 = inlined_call_operand.hbm [shape: f32[128,384], index: 7, kind: input, shape index: {}]
  %s8 = inlined_call_operand.vmem [shape: f32[1,128], index: 8, kind: input, shape index: {}]
  %s9 = inlined_call_operand.vmem [shape: f32[3,24,16], index: 9, kind: input, shape index: {}]
  %s10 = inlined_call_operand.hbm [shape: f32[2,24,128], index: 10, kind: output, shape index: {}]
  %s11 = sld [smem:[#allocation0]]
  $region85: #{tpu_custom_call.1} parent=0
    _
  %s13 = ssub.s32 1, %s11
  %s14 = scalar_select 0, %s13, %s11
  $region1: #{tpu_custom_call.1} parent=0
    #allocation2 [shape = 'u8[196608]{0}', space=vmem, size = 0x30000, scoped, tag = 'input window, operand 1, single buffered']
    #allocation3 [shape = 's32[2]{0}', space=sflag, size = 0x8, scoped, tag = 'scoped memory for tpu_custom_call.1']
    #allocation4 [shape = 's32[2]{0}', space=sflag, size = 0x8, scoped, tag = 'scoped memory for tpu_custom_call.1']
    #allocation5 [shape = 'u8[196608]{0}', space=vmem, size = 0x30000, scoped, tag = 'input window, operand 4, single buffered']
    #allocation6 [shape = 's32[1]{0}', space=sflag, size = 0x4, scoped, tag = 'scoped memory for tpu_custom_call.1']
    #allocation7 [shape = 'u8[196608]{0}', space=vmem, size = 0x30000, scoped, tag = 'input window, operand 7, single buffered']
    #allocation8 [shape = 'u8[24576]{0}', space=vmem, size = 0x6000, scoped, tag = 'output window, operand 0']
    %15 = vsyncpa [#allocation3], 0
    %16 = vsyncpa [#allocation6], 0
    %17 = vsyncpa [#allocation4], 0
    %s18 = scalar_lea.sflag [#allocation4], 1
    %19 = vsyncpa %s18, 0
    loop: start=0, step=1, limit=4
    $region2: #{tpu_custom_call.1} parent=1 // loop_pre_header
      _
    $region3: #{tpu_custom_call.1} parent=1 // loop_header
      %s21 = sphi 0, %s25
      %p22 = scmp.ge.s32.totalorder %s21, 4
      %s31 = sphi 0, %s33
      %s34 = sphi 0, %s31
      %s35 = sphi 0, %s34
      %s51 = sphi 0, %s35
      %s55 = sphi 0, %s55
      %s57 = sphi 0, %s55
      %s58 = sphi 0, %s57
      %s72 = sphi 0, %s58
      %s76 = sphi 0, %s76
      %s78 = sphi 0, %s76
      %s79 = sphi 0, %s78
      %s93 = sphi 0, %s79
      %s97 = sphi 0, %s97
      %s99 = sphi 0, %s97
      %s100 = sphi 0, %s99
      %s114 = sphi 0, %s100
      %s118 = sphi 0, %s118
      %s120 = sphi 0, %s118
      %s121 = sphi 0, %s120
      %s135 = sphi 0, %s121
      %s139 = sphi 0, %s139
      %s141 = sphi 0, %s139
      %s142 = sphi 0, %s141
      %s156 = sphi 0, %s142
      %s160 = sphi 0, %s160
      %s162 = sphi 0, %s160
      %s163 = sphi 0, %s162
      %s177 = sphi 0, %s163
      %s181 = sphi 0, %s181
      %s183 = sphi 0, %s181
      %s184 = sphi 0, %s183
      %s198 = sphi 0, %s184
      %s202 = sphi 0, %s202
      %s204 = sphi 0, %s202
      %s205 = sphi 0, %s204
      %s219 = sphi 0, %s205
      %s223 = sphi 0, %s223
      %s225 = sphi 0, %s223
      %s226 = sphi 0, %s225
      %s240 = sphi 0, %s226
      %s246 = sphi 0, %s248
      %s249 = sphi 0, %s246
      %s250 = sphi 0, %s249
      %s266 = sphi 0, %s250
    $region4: #{tpu_custom_call.1} parent=1 // loop_header_branch
      %24 = sbr.rel (%p22) target = $region8
    $region5: #{tpu_custom_call.1} parent=1 // loop_body
      %s26 = ssub.s32 %s21, 1
      %s27 = ssub.s32 %s21, 2
      %s28 = sadd.s32 %s21, 1
      %s29 = ssub.s32 %s21, %s28
      %p30 = scmp.eq.s32.totalorder %s29, 0
      %s32 = sadd.s32 %s31, 1
      %s33 = scalar_select %p30, %s31, %s32
      %p36 = pneg %p30
      %p37 = scmp.eq.s32.totalorder %s21, 1
      %p38 = por %p36, %p37
      %p39 = scmp.ne.s32.totalorder %s31, %s34
      %p40 = scmp.eq.s32.totalorder %s21, 0
      %p41 = por %p39, %p40
      %p42 = scmp.ne.s32.totalorder %s31, %s34
      %p43 = scmp.eq.s32.totalorder %s26, 1
      %p44 = por %p42, %p43
      %p45 = scmp.ne.s32.totalorder %s34, %s35
      %p46 = scmp.eq.s32.totalorder %s26, 0
      %p47 = por %p45, %p46
      %p48 = scmp.ne.s32.totalorder %s34, %s35
      %p49 = scmp.eq.s32.totalorder %s27, 1
      %p50 = por %p48, %p49
      %p52 = scmp.ne.s32.totalorder %s35, %s51
      %p53 = scmp.eq.s32.totalorder %s27, 0
      %p54 = por %p52, %p53
      %s56 = sadd.s32 %s55, 1
      %p59 = scmp.eq.s32.totalorder %s21, 1
      %p60 = scmp.ne.s32.totalorder %s55, %s57
      %p61 = scmp.eq.s32.totalorder %s21, 0
      %p62 = por %p60, %p61
      %p63 = scmp.ne.s32.totalorder %s55, %s57
      %p64 = scmp.eq.s32.totalorder %s26, 1
      %p65 = por %p63, %p64
      %p66 = scmp.ne.s32.totalorder %s57, %s58
      %p67 = scmp.eq.s32.totalorder %s26, 0
      %p68 = por %p66, %p67
      %p69 = scmp.ne.s32.totalorder %s57, %s58
      %p70 = scmp.eq.s32.totalorder %s27, 1
      %p71 = por %p69, %p70
      %p73 = scmp.ne.s32.totalorder %s58, %s72
      %p74 = scmp.eq.s32.totalorder %s27, 0
      %p75 = por %p73, %p74
      %s77 = sadd.s32 %s76, 1
      %p80 = scmp.eq.s32.totalorder %s21, 1
      %p81 = scmp.ne.s32.totalorder %s76, %s78
      %p82 = scmp.eq.s32.totalorder %s21, 0
      %p83 = por %p81, %p82
      %p84 = scmp.ne.s32.totalorder %s76, %s78
      %p85 = scmp.eq.s32.totalorder %s26, 1
      %p86 = por %p84, %p85
      %p87 = scmp.ne.s32.totalorder %s78, %s79
      %p88 = scmp.eq.s32.totalorder %s26, 0
      %p89 = por %p87, %p88
      %p90 = scmp.ne.s32.totalorder %s78, %s79
      %p91 = scmp.eq.s32.totalorder %s27, 1
      %p92 = por %p90, %p91
      %p94 = scmp.ne.s32.totalorder %s79, %s93
      %p95 = scmp.eq.s32.totalorder %s27, 0
      %p96 = por %p94, %p95
      %s98 = sadd.s32 %s97, 1
      %p101 = scmp.eq.s32.totalorder %s21, 1
      %p102 = scmp.ne.s32.totalorder %s97, %s99
      %p103 = scmp.eq.s32.totalorder %s21, 0
      %p104 = por %p102, %p103
      %p105 = scmp.ne.s32.totalorder %s97, %s99
      %p106 = scmp.eq.s32.totalorder %s26, 1
      %p107 = por %p105, %p106
      %p108 = scmp.ne.s32.totalorder %s99, %s100
      %p109 = scmp.eq.s32.totalorder %s26, 0
      %p110 = por %p108, %p109
      %p111 = scmp.ne.s32.totalorder %s99, %s100
      %p112 = scmp.eq.s32.totalorder %s27, 1
      %p113 = por %p111, %p112
      %p115 = scmp.ne.s32.totalorder %s100, %s114
      %p116 = scmp.eq.s32.totalorder %s27, 0
      %p117 = por %p115, %p116
      %s119 = sadd.s32 %s118, 1
      %p122 = scmp.eq.s32.totalorder %s21, 1
      %p123 = scmp.ne.s32.totalorder %s118, %s120
      %p124 = scmp.eq.s32.totalorder %s21, 0
      %p125 = por %p123, %p124
      %p126 = scmp.ne.s32.totalorder %s118, %s120
      %p127 = scmp.eq.s32.totalorder %s26, 1
      %p128 = por %p126, %p127
      %p129 = scmp.ne.s32.totalorder %s120, %s121
      %p130 = scmp.eq.s32.totalorder %s26, 0
      %p131 = por %p129, %p130
      %p132 = scmp.ne.s32.totalorder %s120, %s121
      %p133 = scmp.eq.s32.totalorder %s27, 1
      %p134 = por %p132, %p133
      %p136 = scmp.ne.s32.totalorder %s121, %s135
      %p137 = scmp.eq.s32.totalorder %s27, 0
      %p138 = por %p136, %p137
      %s140 = sadd.s32 %s139, 1
      %p143 = scmp.eq.s32.totalorder %s21, 1
      %p144 = scmp.ne.s32.totalorder %s139, %s141
      %p145 = scmp.eq.s32.totalorder %s21, 0
      %p146 = por %p144, %p145
      %p147 = scmp.ne.s32.totalorder %s139, %s141
      %p148 = scmp.eq.s32.totalorder %s26, 1
      %p149 = por %p147, %p148
      %p150 = scmp.ne.s32.totalorder %s141, %s142
      %p151 = scmp.eq.s32.totalorder %s26, 0
      %p152 = por %p150, %p151
      %p153 = scmp.ne.s32.totalorder %s141, %s142
      %p154 = scmp.eq.s32.totalorder %s27, 1
      %p155 = por %p153, %p154
      %p157 = scmp.ne.s32.totalorder %s142, %s156
      %p158 = scmp.eq.s32.totalorder %s27, 0
      %p159 = por %p157, %p158
      %s161 = sadd.s32 %s160, 1
      %p164 = scmp.eq.s32.totalorder %s21, 1
      %p165 = scmp.ne.s32.totalorder %s160, %s162
      %p166 = scmp.eq.s32.totalorder %s21, 0
      %p167 = por %p165, %p166
      %p168 = scmp.ne.s32.totalorder %s160, %s162
      %p169 = scmp.eq.s32.totalorder %s26, 1
      %p170 = por %p168, %p169
      %p171 = scmp.ne.s32.totalorder %s162, %s163
      %p172 = scmp.eq.s32.totalorder %s26, 0
      %p173 = por %p171, %p172
      %p174 = scmp.ne.s32.totalorder %s162, %s163
      %p175 = scmp.eq.s32.totalorder %s27, 1
      %p176 = por %p174, %p175
      %p178 = scmp.ne.s32.totalorder %s163, %s177
      %p179 = scmp.eq.s32.totalorder %s27, 0
      %p180 = por %p178, %p179
      %s182 = sadd.s32 %s181, 1
      %p185 = scmp.eq.s32.totalorder %s21, 1
      %p186 = scmp.ne.s32.totalorder %s181, %s183
      %p187 = scmp.eq.s32.totalorder %s21, 0
      %p188 = por %p186, %p187
      %p189 = scmp.ne.s32.totalorder %s181, %s183
      %p190 = scmp.eq.s32.totalorder %s26, 1
      %p191 = por %p189, %p190
      %p192 = scmp.ne.s32.totalorder %s183, %s184
      %p193 = scmp.eq.s32.totalorder %s26, 0
      %p194 = por %p192, %p193
      %p195 = scmp.ne.s32.totalorder %s183, %s184
      %p196 = scmp.eq.s32.totalorder %s27, 1
      %p197 = por %p195, %p196
      %p199 = scmp.ne.s32.totalorder %s184, %s198
      %p200 = scmp.eq.s32.totalorder %s27, 0
      %p201 = por %p199, %p200
      %s203 = sadd.s32 %s202, 1
      %p206 = scmp.eq.s32.totalorder %s21, 1
      %p207 = scmp.ne.s32.totalorder %s202, %s204
      %p208 = scmp.eq.s32.totalorder %s21, 0
      %p209 = por %p207, %p208
      %p210 = scmp.ne.s32.totalorder %s202, %s204
      %p211 = scmp.eq.s32.totalorder %s26, 1
      %p212 = por %p210, %p211
      %p213 = scmp.ne.s32.totalorder %s204, %s205
      %p214 = scmp.eq.s32.totalorder %s26, 0
      %p215 = por %p213, %p214
      %p216 = scmp.ne.s32.totalorder %s204, %s205
      %p217 = scmp.eq.s32.totalorder %s27, 1
      %p218 = por %p216, %p217
      %p220 = scmp.ne.s32.totalorder %s205, %s219
      %p221 = scmp.eq.s32.totalorder %s27, 0
      %p222 = por %p220, %p221
      %s224 = sadd.s32 %s223, 1
      %p227 = scmp.eq.s32.totalorder %s21, 1
      %p228 = scmp.ne.s32.totalorder %s223, %s225
      %p229 = scmp.eq.s32.totalorder %s21, 0
      %p230 = por %p228, %p229
      %p231 = scmp.ne.s32.totalorder %s223, %s225
      %p232 = scmp.eq.s32.totalorder %s26, 1
      %p233 = por %p231, %p232
      %p234 = scmp.ne.s32.totalorder %s225, %s226
      %p235 = scmp.eq.s32.totalorder %s26, 0
      %p236 = por %p234, %p235
      %p237 = scmp.ne.s32.totalorder %s225, %s226
      %p238 = scmp.eq.s32.totalorder %s27, 1
      %p239 = por %p237, %p238
      %p241 = scmp.ne.s32.totalorder %s226, %s240
      %p242 = scmp.eq.s32.totalorder %s27, 0
      %p243 = por %p241, %p242
      %s244 = ssub.s32 %s21, %s28
      %p245 = scmp.eq.s32.totalorder %s244, 0
      %s247 = sadd.s32 %s246, 1
      %s248 = scalar_select %p245, %s246, %s247
      %p251 = pneg %p245
      %p252 = scmp.eq.s32.totalorder %s21, 1
      %p253 = por %p251, %p252
      %p254 = scmp.ne.s32.totalorder %s246, %s249
      %p255 = scmp.eq.s32.totalorder %s21, 0
      %p256 = por %p254, %p255
      %p257 = scmp.ne.s32.totalorder %s246, %s249
      %p258 = scmp.eq.s32.totalorder %s26, 1
      %p259 = por %p257, %p258
      %p260 = scmp.ne.s32.totalorder %s249, %s250
      %p261 = scmp.eq.s32.totalorder %s26, 0
      %p262 = por %p260, %p261
      %p263 = scmp.ne.s32.totalorder %s249, %s250
      %p264 = scmp.eq.s32.totalorder %s27, 1
      %p265 = por %p263, %p264
      %p267 = scmp.ne.s32.totalorder %s250, %s266
      %p268 = scmp.eq.s32.totalorder %s27, 0
      %p269 = por %p267, %p268
      %p270 = scmp.le.s32.totalorder 1, %s21
      %p271 = scmp.lt.s32.totalorder %s21, 3
      %p272 = pnand %p270, %p271
      %p273 = pneg %p272
      // Predicated region
      $region9: #{tpu_custom_call.1} parent=5 // pred_check
        _
      $region10: #{tpu_custom_call.1} parent=5 // pred_check_branch
        %275 = sbr.rel (%p272) target = $region12
      $region11: #{tpu_custom_call.1} parent=5 // pred_region
        %s276 = ssub.s32 %s21, 1
        // Predicated region
        $region13: #{tpu_custom_call.1} parent=11 // pred_check
          %p277 = pneg %p68
        $region14: #{tpu_custom_call.1} parent=11 // pred_check_branch
          %279 = sbr.rel (%p277) target = $region16
        $region15: #{tpu_custom_call.1} parent=11 // pred_region
          %s281 = ssub.s32 6144, 6144
          %282 = vsyncadd [#allocation3], %s281
          %s283 = sshll.u32 [#allocation2], 4
          %s284 = int_to_ptr.vmem [resolvable:$true] %s283
          %289 = dma.hbm_to_vmem [thread:$0]  %s1, 6144, %s284, [#allocation3], 384, 384, 24
        $region16: #{tpu_custom_call.1} parent=11 // pred_fallthru
          _
        // Predicated region
        $region17: #{tpu_custom_call.1} parent=11 // pred_check
          %p290 = pneg %p89
        $region18: #{tpu_custom_call.1} parent=11 // pred_check_branch
          %292 = sbr.rel (%p290) target = $region20
        $region19: #{tpu_custom_call.1} parent=11 // pred_region
          _
        $region20: #{tpu_custom_call.1} parent=11 // pred_fallthru
          _
        // Predicated region
        $region21: #{tpu_custom_call.1} parent=11 // pred_check
          %p293 = pneg %p110
        $region22: #{tpu_custom_call.1} parent=11 // pred_check_branch
          %295 = sbr.rel (%p293) target = $region24
        $region23: #{tpu_custom_call.1} parent=11 // pred_region
          _
        $region24: #{tpu_custom_call.1} parent=11 // pred_fallthru
          _
        // Predicated region
        $region25: #{tpu_custom_call.1} parent=11 // pred_check
          %p296 = pneg %p131
        $region26: #{tpu_custom_call.1} parent=11 // pred_check_branch
          %298 = sbr.rel (%p296) target = $region28
        $region27: #{tpu_custom_call.1} parent=11 // pred_region
          %s300 = ssub.s32 6144, 6144
          %301 = vsyncadd [#allocation6], %s300
          %s302 = sshll.u32 [#allocation5], 4
          %s303 = int_to_ptr.vmem [resolvable:$true] %s302
          %308 = dma.hbm_to_vmem [thread:$0]  %s4, 6144, %s303, [#allocation6], 384, 384, 24
        $region28: #{tpu_custom_call.1} parent=11 // pred_fallthru
          _
        // Predicated region
        $region29: #{tpu_custom_call.1} parent=11 // pred_check
          %p309 = pneg %p152
        $region30: #{tpu_custom_call.1} parent=11 // pred_check_branch
          %311 = sbr.rel (%p309) target = $region32
        $region31: #{tpu_custom_call.1} parent=11 // pred_region
          _
        $region32: #{tpu_custom_call.1} parent=11 // pred_fallthru
          _
        // Predicated region
        $region33: #{tpu_custom_call.1} parent=11 // pred_check
          %p312 = pneg %p173
        $region34: #{tpu_custom_call.1} parent=11 // pred_check_branch
          %314 = sbr.rel (%p312) target = $region36
        $region35: #{tpu_custom_call.1} parent=11 // pred_region
          _
        $region36: #{tpu_custom_call.1} parent=11 // pred_fallthru
          _
        // Predicated region
        $region37: #{tpu_custom_call.1} parent=11 // pred_check
          %p315 = pneg %p194
        $region38: #{tpu_custom_call.1} parent=11 // pred_check_branch
          %317 = sbr.rel (%p315) target = $region40
        $region39: #{tpu_custom_call.1} parent=11 // pred_region
          %s319 = ssub.s32 6144, 6144
          %320 = vsyncadd [#allocation6], %s319
          %s321 = sshll.u32 [#allocation7], 4
          %s322 = int_to_ptr.vmem [resolvable:$true] %s321
          %327 = dma.hbm_to_vmem [thread:$0]  %s7, 6144, %s322, [#allocation6], 384, 384, 24
        $region40: #{tpu_custom_call.1} parent=11 // pred_fallthru
          _
        // Predicated region
        $region41: #{tpu_custom_call.1} parent=11 // pred_check
          %p328 = pneg %p215
        $region42: #{tpu_custom_call.1} parent=11 // pred_check_branch
          %330 = sbr.rel (%p328) target = $region44
        $region43: #{tpu_custom_call.1} parent=11 // pred_region
          _
        $region44: #{tpu_custom_call.1} parent=11 // pred_fallthru
          _
        // Predicated region
        $region45: #{tpu_custom_call.1} parent=11 // pred_check
          %p331 = pneg %p236
        $region46: #{tpu_custom_call.1} parent=11 // pred_check_branch
          %333 = sbr.rel (%p331) target = $region48
        $region47: #{tpu_custom_call.1} parent=11 // pred_region
          _
        $region48: #{tpu_custom_call.1} parent=11 // pred_fallthru
          _
      $region12: #{tpu_custom_call.1} parent=5 // pred_fallthru
        _
      %p334 = scmp.lt.s32.totalorder %s21, 2
      // Predicated region
      $region49: #{tpu_custom_call.1} parent=5 // pred_check
        %p335 = pneg %p334
      $region50: #{tpu_custom_call.1} parent=5 // pred_check_branch
        %337 = sbr.rel (%p335) target = $region52
      $region51: #{tpu_custom_call.1} parent=5 // pred_region
        // Predicated region
        $region53: #{tpu_custom_call.1} parent=51 // pred_check
          %p338 = pneg %p41
        $region54: #{tpu_custom_call.1} parent=51 // pred_check_branch
          %340 = sbr.rel (%p338) target = $region56
        $region55: #{tpu_custom_call.1} parent=51 // pred_region
          %p341 = scmp.lt.s32.totalorder %s21, 1
          %s342 = scalar_select %p341, %s21, 1
          %s343 = smul.addr %s342, 8
          %s344 = scalar_lea.vmem %s0, %s343
        $region56: #{tpu_custom_call.1} parent=51 // pred_fallthru
          _
      $region52: #{tpu_custom_call.1} parent=5 // pred_fallthru
        _
      %p345 = scmp.le.s32.totalorder 1, %s21
      %p346 = scmp.lt.s32.totalorder %s21, 3
      %p347 = pnand %p345, %p346
      %p348 = pneg %p347
      // Predicated region
      $region57: #{tpu_custom_call.1} parent=5 // pred_check
        _
      $region58: #{tpu_custom_call.1} parent=5 // pred_check_branch
        %350 = sbr.rel (%p347) target = $region60
      $region59: #{tpu_custom_call.1} parent=5 // pred_region
        %s351 = ssub.s32 %s21, 1
        // Predicated region
        $region61: #{tpu_custom_call.1} parent=59 // pred_check
          %p352 = pneg %p68
        $region62: #{tpu_custom_call.1} parent=59 // pred_check_branch
          %354 = sbr.rel (%p352) target = $region64
        $region63: #{tpu_custom_call.1} parent=59 // pred_region
          %355 = dma.done [#allocation3], 6144
        $region64: #{tpu_custom_call.1} parent=59 // pred_fallthru
          _
        // Predicated region
        $region65: #{tpu_custom_call.1} parent=59 // pred_check
          %p356 = pneg %p131
        $region66: #{tpu_custom_call.1} parent=59 // pred_check_branch
          %358 = sbr.rel (%p356) target = $region68
        $region67: #{tpu_custom_call.1} parent=59 // pred_region
          %359 = dma.done [#allocation6], 6144
        $region68: #{tpu_custom_call.1} parent=59 // pred_fallthru
          _
        // Predicated region
        $region69: #{tpu_custom_call.1} parent=59 // pred_check
          %p360 = pneg %p194
        $region70: #{tpu_custom_call.1} parent=59 // pred_check_branch
          %362 = sbr.rel (%p360) target = $region72
        $region71: #{tpu_custom_call.1} parent=59 // pred_region
          %363 = dma.done [#allocation6], 6144
        $region72: #{tpu_custom_call.1} parent=59 // pred_fallthru
          _
        %p364 = scmp.lt.s32.totalorder %s26, 1
        %s365 = scalar_select %p364, %s26, 1
        %s366 = smul.addr %s365, 8
        %s367 = scalar_lea.vmem %s0, %s366
        %p368 = pneg %p47
        %p369 = pneg %p44
        %p370 = pneg %p68
        %p371 = pneg %p65
        %p372 = pneg %p89
        %p373 = pneg %p86
        %p374 = pneg %p110
        %p375 = pneg %p107
        %p376 = pneg %p131
        %p377 = pneg %p128
        %p378 = pneg %p152
        %p379 = pneg %p149
        %p380 = pneg %p173
        %p381 = pneg %p170
        %p382 = pneg %p194
        %p383 = pneg %p191
        %p384 = pneg %p215
        %p385 = pneg %p212
        %p386 = pneg %p236
        %p387 = pneg %p233
        %p388 = pneg %p262
        %p389 = pneg %p259
        %s390 = sand.u32 %s249, 1
        %s391 = scalar_lea.sflag [#allocation4], %s390
        %s392 = sand.u32 %s249, 1
        %s393 = smul.addr %s392, 24
        %s394 = scalar_lea.vmem [#allocation8], %s393
        %p395 = scmp.lt.s32.totalorder %s26, 1
        %s396 = scalar_select %p395, %s26, 1
        %s397 = smul.addr %s396, 8
        %s398 = scalar_lea.vmem %s0, %s397
        %v399 = vld [vmem:[%s398] sm:$0xff]
        %v400 = vld [vmem:[#allocation2] sm:$0xff]
        %v401 = vld [vmem:[#allocation2 + $0x8] sm:$0xff]
        %v402 = vld [vmem:[#allocation2 + $0x10] sm:$0xff]
        %v403 = vld [vmem:[#allocation2 + $0x18] sm:$0xff]
        %v404 = vld [vmem:[#allocation2 + $0x20] sm:$0xff]
        %v405 = vld [vmem:[#allocation2 + $0x28] sm:$0xff]
        %v406 = vld [vmem:[#allocation2 + $0x30] sm:$0xff]
        %v407 = vld [vmem:[#allocation2 + $0x38] sm:$0xff]
        %v408 = vld [vmem:[#allocation2 + $0x40] sm:$0xff]
        %v409 = vld [vmem:[#allocation2 + $0x48] sm:$0xff]
        %v410 = vld [vmem:[#allocation2 + $0x50] sm:$0xff]
        %v411 = vld [vmem:[#allocation2 + $0x58] sm:$0xff]
        %v412 = vld [vmem:[#allocation2 + $0x60] sm:$0xff]
        %v413 = vld [vmem:[#allocation2 + $0x68] sm:$0xff]
        %v414 = vld [vmem:[#allocation2 + $0x70] sm:$0xff]
        %v415 = vld [vmem:[#allocation2 + $0x78] sm:$0xff]
        %v416 = vld [vmem:[#allocation2 + $0x80] sm:$0xff]
        %v417 = vld [vmem:[#allocation2 + $0x88] sm:$0xff]
        %v418 = vld [vmem:[#allocation2 + $0x90] sm:$0xff]
        %v419 = vld [vmem:[#allocation2 + $0x98] sm:$0xff]
        %v420 = vld [vmem:[#allocation2 + $0xa0] sm:$0xff]
        %v421 = vld [vmem:[#allocation2 + $0xa8] sm:$0xff]
        %v422 = vld [vmem:[#allocation2 + $0xb0] sm:$0xff]
        %v423 = vld [vmem:[#allocation2 + $0xb8] sm:$0xff]
        %v424 = vld [vmem:[#allocation2 + $0xc0] sm:$0xff]
        %v425 = vld [vmem:[#allocation2 + $0xc8] sm:$0xff]
        %v426 = vld [vmem:[#allocation2 + $0xd0] sm:$0xff]
        %v427 = vld [vmem:[#allocation2 + $0xd8] sm:$0xff]
        %v428 = vld [vmem:[#allocation2 + $0xe0] sm:$0xff]
        %v429 = vld [vmem:[#allocation2 + $0xe8] sm:$0xff]
        %v430 = vld [vmem:[#allocation2 + $0xf0] sm:$0xff]
        %v431 = vld [vmem:[#allocation2 + $0xf8] sm:$0xff]
        %v432 = vld [vmem:[#allocation2 + $0x100] sm:$0xff]
        %v433 = vld [vmem:[#allocation2 + $0x108] sm:$0xff]
        %v434 = vld [vmem:[#allocation2 + $0x110] sm:$0xff]
        %v435 = vld [vmem:[#allocation2 + $0x118] sm:$0xff]
        %v436 = vld [vmem:[#allocation2 + $0x120] sm:$0xff]
        %v437 = vld [vmem:[#allocation2 + $0x128] sm:$0xff]
        %v438 = vld [vmem:[#allocation2 + $0x130] sm:$0xff]
        %v439 = vld [vmem:[#allocation2 + $0x138] sm:$0xff]
        %v440 = vld [vmem:[#allocation2 + $0x140] sm:$0xff]
        %v441 = vld [vmem:[#allocation2 + $0x148] sm:$0xff]
        %v442 = vld [vmem:[#allocation2 + $0x150] sm:$0xff]
        %v443 = vld [vmem:[#allocation2 + $0x158] sm:$0xff]
        %v444 = vld [vmem:[#allocation2 + $0x160] sm:$0xff]
        %v445 = vld [vmem:[#allocation2 + $0x168] sm:$0xff]
        %v446 = vld [vmem:[#allocation2 + $0x170] sm:$0xff]
        %v447 = vld [vmem:[#allocation2 + $0x178] sm:$0xff]
        %448 = vmatprep.subr.mxu0 %v446
        %449 = vmatpush1.msra.mxu0 %v445
        %450 = vmatprep.subr.mxu0 %v443
        %451 = vmatpush1.msra.mxu0 %v442
        %452 = vmatprep.subr.mxu0 %v440
        %453 = vmatpush1.msra.mxu0 %v439
        %454 = vmatprep.subr.mxu0 %v437
        %455 = vmatpush1.msra.mxu0 %v436
        %456 = vmatprep.subr.mxu0 %v434
        %457 = vmatpush1.msra.mxu0 %v433
        %458 = vmatprep.subr.mxu0 %v431
        %459 = vmatpush1.msra.mxu0 %v430
        %460 = vmatprep.subr.mxu0 %v428
        %461 = vmatpush1.msra.mxu0 %v427
        %462 = vmatprep.subr.mxu0 %v425
        %463 = vmatpush1.msra.mxu0 %v424
        %464 = vmatprep.subr.mxu0 %v422
        %465 = vmatpush1.msra.mxu0 %v421
        %466 = vmatprep.subr.mxu0 %v419
        %467 = vmatpush1.msra.mxu0 %v418
        %468 = vmatprep.subr.mxu0 %v416
        %469 = vmatpush1.msra.mxu0 %v415
        %470 = vmatprep.subr.mxu0 %v413
        %471 = vmatpush1.msra.mxu0 %v412
        %472 = vmatprep.subr.mxu0 %v410
        %473 = vmatpush1.msra.mxu0 %v409
        %474 = vmatprep.subr.mxu0 %v407
        %475 = vmatpush1.msra.mxu0 %v406
        %476 = vmatprep.subr.mxu0 %v404
        %477 = vmatpush1.msra.mxu0 %v403
        %478 = vmatprep.subr.mxu0 %v401
        %479 = vmatpush1.msra.mxu0 %v400
        %480 = vmatprep.subr.mxu0 0.0
        %481 = vmatpush2.msra.mxu0 0.0
        %482 = vmatprep.subr.mxu0 0.0
        %483 = vmatpush2.msra.mxu0 0.0
        %484 = vmatprep.subr.mxu0 0.0
        %485 = vmatpush2.msra.mxu0 0.0
        %486 = vmatprep.subr.mxu0 0.0
        %487 = vmatpush2.msra.mxu0 0.0
        %488 = vmatprep.subr.mxu0 0.0
        %489 = vmatpush2.msra.mxu0 0.0
        %490 = vmatprep.subr.mxu0 0.0
        %491 = vmatpush2.msra.mxu0 0.0
        %492 = vmatprep.subr.mxu0 0.0
        %493 = vmatpush2.msra.mxu0 0.0
        %494 = vmatprep.subr.mxu0 0.0
        %495 = vmatpush2.msra.mxu0 0.0
        %496 = vmatprep.subr.mxu0 0.0
        %497 = vmatpush2.msra.mxu0 0.0
        %498 = vmatprep.subr.mxu0 0.0
        %499 = vmatpush2.msra.mxu0 0.0
        %500 = vmatprep.subr.mxu0 0.0
        %501 = vmatpush2.msra.mxu0 0.0
        %502 = vmatprep.subr.mxu0 0.0
        %503 = vmatpush2.msra.mxu0 0.0
        %504 = vmatprep.subr.mxu0 0.0
        %505 = vmatpush2.msra.mxu0 0.0
        %506 = vmatprep.subr.mxu0 0.0
        %507 = vmatpush2.msra.mxu0 0.0
        %508 = vmatprep.subr.mxu0 0.0
        %509 = vmatpush2.msra.mxu0 0.0
        %510 = vmatprep.subr.mxu0 0.0
        %511 = vmatpush2.msra.mxu0 0.0
        %512 = vmatprep.mubr.f32.mxu0 0.0
        %513 = vmatmul.mubr.f32.gmra.mxu0 %v399
        %v514 = vpop.f32.mrf.mxu0
        %v515 = vadd.f32 0.0, %v514
        %v516 = vpop.f32.mrf.mxu0
        %v517 = vadd.f32 0.0, %v516
        %518 = vdwg.mxu0
        %519 = vmatprep.subr.mxu0 0.0
        %520 = vmatpush1.msra.mxu0 %v447
        %521 = vmatprep.subr.mxu0 0.0
        %522 = vmatpush1.msra.mxu0 %v444
        %523 = vmatprep.subr.mxu0 0.0
        %524 = vmatpush1.msra.mxu0 %v441
        %525 = vmatprep.subr.mxu0 0.0
        %526 = vmatpush1.msra.mxu0 %v438
        %527 = vmatprep.subr.mxu0 0.0
        %528 = vmatpush1.msra.mxu0 %v435
        %529 = vmatprep.subr.mxu0 0.0
        %530 = vmatpush1.msra.mxu0 %v432
        %531 = vmatprep.subr.mxu0 0.0
        %532 = vmatpush1.msra.mxu0 %v429
        %533 = vmatprep.subr.mxu0 0.0
        %534 = vmatpush1.msra.mxu0 %v426
        %535 = vmatprep.subr.mxu0 0.0
        %536 = vmatpush1.msra.mxu0 %v423
        %537 = vmatprep.subr.mxu0 0.0
        %538 = vmatpush1.msra.mxu0 %v420
        %539 = vmatprep.subr.mxu0 0.0
        %540 = vmatpush1.msra.mxu0 %v417
        %541 = vmatprep.subr.mxu0 0.0
        %542 = vmatpush1.msra.mxu0 %v414
        %543 = vmatprep.subr.mxu0 0.0
        %544 = vmatpush1.msra.mxu0 %v411
        %545 = vmatprep.subr.mxu0 0.0
        %546 = vmatpush1.msra.mxu0 %v408
        %547 = vmatprep.subr.mxu0 0.0
        %548 = vmatpush1.msra.mxu0 %v405
        %549 = vmatprep.subr.mxu0 0.0
        %550 = vmatpush1.msra.mxu0 %v402
        %551 = vmatprep.subr.mxu0 0.0
        %552 = vmatpush2.msra.mxu0 0.0
        %553 = vmatprep.subr.mxu0 0.0
        %554 = vmatpush2.msra.mxu0 0.0
        %555 = vmatprep.subr.mxu0 0.0
        %556 = vmatpush2.msra.mxu0 0.0
        %557 = vmatprep.subr.mxu0 0.0
        %558 = vmatpush2.msra.mxu0 0.0
        %559 = vmatprep.subr.mxu0 0.0
        %560 = vmatpush2.msra.mxu0 0.0
        %561 = vmatprep.subr.mxu0 0.0
        %562 = vmatpush2.msra.mxu0 0.0
        %563 = vmatprep.subr.mxu0 0.0
        %564 = vmatpush2.msra.mxu0 0.0
        %565 = vmatprep.subr.mxu0 0.0
        %566 = vmatpush2.msra.mxu0 0.0
        %567 = vmatprep.subr.mxu0 0.0
        %568 = vmatpush2.msra.mxu0 0.0
        %569 = vmatprep.subr.mxu0 0.0
        %570 = vmatpush2.msra.mxu0 0.0
        %571 = vmatprep.subr.mxu0 0.0
        %572 = vmatpush2.msra.mxu0 0.0
        %573 = vmatprep.subr.mxu0 0.0
        %574 = vmatpush2.msra.mxu0 0.0
        %575 = vmatprep.subr.mxu0 0.0
        %576 = vmatpush2.msra.mxu0 0.0
        %577 = vmatprep.subr.mxu0 0.0
        %578 = vmatpush2.msra.mxu0 0.0
        %579 = vmatprep.subr.mxu0 0.0
        %580 = vmatpush2.msra.mxu0 0.0
        %581 = vmatprep.subr.mxu0 0.0
        %582 = vmatpush2.msra.mxu0 0.0
        %583 = vmatprep.mubr.f32.mxu0 0.0
        %584 = vmatmul.mubr.f32.gmra.mxu0 %v399
        %v585 = vpop.f32.mrf.mxu0
        %v586 = vadd.f32 0.0, %v585
        %v587 = vpop.f32.mrf.mxu0
        %588 = vdwg.mxu0
        %v589 = vld [vmem:[%s3] sm:$0xff]
        %s590 = scalar_lea.vmem %s3, 8
        %v591 = vld [vmem:[%s590] sm:$0xff]
        %vm592 = vcmask 64512
        %v594 = vsel %vm592, %v591, 0
        %596 = vmatprep.subr.mxu0 0.0
        %597 = vmatpush1.msra.mxu0 0.0
        %598 = vmatprep.subr.mxu0 0.0
        %599 = vmatpush1.msra.mxu0 0.0
        %600 = vmatprep.subr.mxu0 0.0
        %601 = vmatpush1.msra.mxu0 0.0
        %602 = vmatprep.subr.mxu0 0.0
        %603 = vmatpush1.msra.mxu0 0.0
        %604 = vmatprep.subr.mxu0 0.0
        %605 = vmatpush1.msra.mxu0 0.0
        %606 = vmatprep.subr.mxu0 0.0
        %607 = vmatpush1.msra.mxu0 0.0
        %608 = vmatprep.subr.mxu0 0.0
        %609 = vmatpush1.msra.mxu0 0.0
        %610 = vmatprep.subr.mxu0 0.0
        %611 = vmatpush1.msra.mxu0 0.0
        %612 = vmatprep.subr.mxu0 0.0
        %613 = vmatpush1.msra.mxu0 0.0
        %614 = vmatprep.subr.mxu0 0.0
        %615 = vmatpush1.msra.mxu0 0.0
        %616 = vmatprep.subr.mxu0 0.0
        %617 = vmatpush1.msra.mxu0 0.0
        %618 = vmatprep.subr.mxu0 0.0
        %619 = vmatpush1.msra.mxu0 0.0
        %620 = vmatprep.subr.mxu0 0.0
        %621 = vmatpush1.msra.mxu0 0.0
        %622 = vmatprep.subr.mxu0 0.0
        %623 = vmatpush1.msra.mxu0 0.0
        %624 = vmatprep.subr.mxu0 0.0
        %625 = vmatpush1.msra.mxu0 0.0
        %626 = vmatprep.subr.mxu0 0.0
        %627 = vmatpush1.msra.mxu0 %v517
        %628 = vmatprep.subr.mxu0 0.0
        %629 = vmatpush2.msra.mxu0 0.0
        %630 = vmatprep.subr.mxu0 0.0
        %631 = vmatpush2.msra.mxu0 0.0
        %632 = vmatprep.subr.mxu0 0.0
        %633 = vmatpush2.msra.mxu0 0.0
        %634 = vmatprep.subr.mxu0 0.0
        %635 = vmatpush2.msra.mxu0 0.0
        %636 = vmatprep.subr.mxu0 0.0
        %637 = vmatpush2.msra.mxu0 0.0
        %638 = vmatprep.subr.mxu0 0.0
        %639 = vmatpush2.msra.mxu0 0.0
        %640 = vmatprep.subr.mxu0 0.0
        %641 = vmatpush2.msra.mxu0 0.0
        %642 = vmatprep.subr.mxu0 0.0
        %643 = vmatpush2.msra.mxu0 0.0
        %644 = vmatprep.subr.mxu0 0.0
        %645 = vmatpush2.msra.mxu0 0.0
        %646 = vmatprep.subr.mxu0 0.0
        %647 = vmatpush2.msra.mxu0 0.0
        %648 = vmatprep.subr.mxu0 0.0
        %649 = vmatpush2.msra.mxu0 0.0
        %650 = vmatprep.subr.mxu0 0.0
        %651 = vmatpush2.msra.mxu0 0.0
        %652 = vmatprep.subr.mxu0 0.0
        %653 = vmatpush2.msra.mxu0 0.0
        %654 = vmatprep.subr.mxu0 0.0
        %655 = vmatpush2.msra.mxu0 0.0
        %656 = vmatprep.subr.mxu0 0.0
        %657 = vmatpush2.msra.mxu0 0.0
        %658 = vmatprep.subr.mxu0 0.0
        %659 = vmatpush2.msra.mxu0 0.0
        %660 = vmatprep.mubr.f32.mxu0 0.0
        %661 = vmatmul.mubr.f32.gmra.mxu0 %v594
        %v662 = vpop.f32.mrf.mxu0
        %v663 = vadd.f32 0.0, %v662
        %v664 = vpop.f32.mrf.mxu0
        %665 = vdwg.mxu0
        %v667 = vsel %vm592, %v589, 0
        %669 = vmatprep.subr.mxu0 0.0
        %670 = vmatpush1.msra.mxu0 0.0
        %671 = vmatprep.subr.mxu0 0.0
        %672 = vmatpush1.msra.mxu0 0.0
        %673 = vmatprep.subr.mxu0 0.0
        %674 = vmatpush1.msra.mxu0 0.0
        %675 = vmatprep.subr.mxu0 0.0
        %676 = vmatpush1.msra.mxu0 0.0
        %677 = vmatprep.subr.mxu0 0.0
        %678 = vmatpush1.msra.mxu0 0.0
        %679 = vmatprep.subr.mxu0 0.0
        %680 = vmatpush1.msra.mxu0 0.0
        %681 = vmatprep.subr.mxu0 0.0
        %682 = vmatpush1.msra.mxu0 0.0
        %683 = vmatprep.subr.mxu0 0.0
        %684 = vmatpush1.msra.mxu0 0.0
        %685 = vmatprep.subr.mxu0 0.0
        %686 = vmatpush1.msra.mxu0 0.0
        %687 = vmatprep.subr.mxu0 0.0
        %688 = vmatpush1.msra.mxu0 0.0
        %689 = vmatprep.subr.mxu0 0.0
        %690 = vmatpush1.msra.mxu0 0.0
        %691 = vmatprep.subr.mxu0 0.0
        %692 = vmatpush1.msra.mxu0 0.0
        %693 = vmatprep.subr.mxu0 0.0
        %694 = vmatpush1.msra.mxu0 0.0
        %695 = vmatprep.subr.mxu0 0.0
        %696 = vmatpush1.msra.mxu0 0.0
        %697 = vmatprep.subr.mxu0 0.0
        %698 = vmatpush1.msra.mxu0 0.0
        %699 = vmatprep.subr.mxu0 0.0
        %700 = vmatpush1.msra.mxu0 %v515
        %701 = vmatprep.subr.mxu0 0.0
        %702 = vmatpush2.msra.mxu0 0.0
        %703 = vmatprep.subr.mxu0 0.0
        %704 = vmatpush2.msra.mxu0 0.0
        %705 = vmatprep.subr.mxu0 0.0
        %706 = vmatpush2.msra.mxu0 0.0
        %707 = vmatprep.subr.mxu0 0.0
        %708 = vmatpush2.msra.mxu0 0.0
        %709 = vmatprep.subr.mxu0 0.0
        %710 = vmatpush2.msra.mxu0 0.0
        %711 = vmatprep.subr.mxu0 0.0
        %712 = vmatpush2.msra.mxu0 0.0
        %713 = vmatprep.subr.mxu0 0.0
        %714 = vmatpush2.msra.mxu0 0.0
        %715 = vmatprep.subr.mxu0 0.0
        %716 = vmatpush2.msra.mxu0 0.0
        %717 = vmatprep.subr.mxu0 0.0
        %718 = vmatpush2.msra.mxu0 0.0
        %719 = vmatprep.subr.mxu0 0.0
        %720 = vmatpush2.msra.mxu0 0.0
        %721 = vmatprep.subr.mxu0 0.0
        %722 = vmatpush2.msra.mxu0 0.0
        %723 = vmatprep.subr.mxu0 0.0
        %724 = vmatpush2.msra.mxu0 0.0
        %725 = vmatprep.subr.mxu0 0.0
        %726 = vmatpush2.msra.mxu0 0.0
        %727 = vmatprep.subr.mxu0 0.0
        %728 = vmatpush2.msra.mxu0 0.0
        %729 = vmatprep.subr.mxu0 0.0
        %730 = vmatpush2.msra.mxu0 0.0
        %731 = vmatprep.subr.mxu0 0.0
        %732 = vmatpush2.msra.mxu0 0.0
        %733 = vmatprep.mubr.f32.mxu0 0.0
        %734 = vmatmul.mubr.f32.gmra.mxu0 %v667
        %v735 = vpop.f32.mrf.mxu0
        %v736 = vadd.f32 %v663, %v735
        %v737 = vpop.f32.mrf.mxu0
        %738 = vdwg.mxu0
        %s739 = scalar_lea.vmem %s3, 16
        %v740 = vld [vmem:[%s739] sm:$0xff]
        %v742 = vsel %vm592, %v740, 0
        %744 = vmatprep.subr.mxu0 0.0
        %745 = vmatpush1.msra.mxu0 0.0
        %746 = vmatprep.subr.mxu0 0.0
        %747 = vmatpush1.msra.mxu0 0.0
        %748 = vmatprep.subr.mxu0 0.0
        %749 = vmatpush1.msra.mxu0 0.0
        %750 = vmatprep.subr.mxu0 0.0
        %751 = vmatpush1.msra.mxu0 0.0
        %752 = vmatprep.subr.mxu0 0.0
        %753 = vmatpush1.msra.mxu0 0.0
        %754 = vmatprep.subr.mxu0 0.0
        %755 = vmatpush1.msra.mxu0 0.0
        %756 = vmatprep.subr.mxu0 0.0
        %757 = vmatpush1.msra.mxu0 0.0
        %758 = vmatprep.subr.mxu0 0.0
        %759 = vmatpush1.msra.mxu0 0.0
        %760 = vmatprep.subr.mxu0 0.0
        %761 = vmatpush1.msra.mxu0 0.0
        %762 = vmatprep.subr.mxu0 0.0
        %763 = vmatpush1.msra.mxu0 0.0
        %764 = vmatprep.subr.mxu0 0.0
        %765 = vmatpush1.msra.mxu0 0.0
        %766 = vmatprep.subr.mxu0 0.0
        %767 = vmatpush1.msra.mxu0 0.0
        %768 = vmatprep.subr.mxu0 0.0
        %769 = vmatpush1.msra.mxu0 0.0
        %770 = vmatprep.subr.mxu0 0.0
        %771 = vmatpush1.msra.mxu0 0.0
        %772 = vmatprep.subr.mxu0 0.0
        %773 = vmatpush1.msra.mxu0 0.0
        %774 = vmatprep.subr.mxu0 0.0
        %775 = vmatpush1.msra.mxu0 %v586
        %776 = vmatprep.subr.mxu0 0.0
        %777 = vmatpush2.msra.mxu0 0.0
        %778 = vmatprep.subr.mxu0 0.0
        %779 = vmatpush2.msra.mxu0 0.0
        %780 = vmatprep.subr.mxu0 0.0
        %781 = vmatpush2.msra.mxu0 0.0
        %782 = vmatprep.subr.mxu0 0.0
        %783 = vmatpush2.msra.mxu0 0.0
        %784 = vmatprep.subr.mxu0 0.0
        %785 = vmatpush2.msra.mxu0 0.0
        %786 = vmatprep.subr.mxu0 0.0
        %787 = vmatpush2.msra.mxu0 0.0
        %788 = vmatprep.subr.mxu0 0.0
        %789 = vmatpush2.msra.mxu0 0.0
        %790 = vmatprep.subr.mxu0 0.0
        %791 = vmatpush2.msra.mxu0 0.0
        %792 = vmatprep.subr.mxu0 0.0
        %793 = vmatpush2.msra.mxu0 0.0
        %794 = vmatprep.subr.mxu0 0.0
        %795 = vmatpush2.msra.mxu0 0.0
        %796 = vmatprep.subr.mxu0 0.0
        %797 = vmatpush2.msra.mxu0 0.0
        %798 = vmatprep.subr.mxu0 0.0
        %799 = vmatpush2.msra.mxu0 0.0
        %800 = vmatprep.subr.mxu0 0.0
        %801 = vmatpush2.msra.mxu0 0.0
        %802 = vmatprep.subr.mxu0 0.0
        %803 = vmatpush2.msra.mxu0 0.0
        %804 = vmatprep.subr.mxu0 0.0
        %805 = vmatpush2.msra.mxu0 0.0
        %806 = vmatprep.subr.mxu0 0.0
        %807 = vmatpush2.msra.mxu0 0.0
        %808 = vmatprep.mubr.f32.mxu0 0.0
        %809 = vmatmul.mubr.f32.gmra.mxu0 %v742
        %v810 = vpop.f32.mrf.mxu0
        %v811 = vadd.f32 0.0, %v810
        %v812 = vpop.f32.mrf.mxu0
        %813 = vdwg.mxu0
        %v814 = vadd.f32 %v736, %v811
        %v815 = vld [vmem:[%s2] sm:$0x1]
        %v817 = vlaneseq
        %v818 = vshrl.u32 %v817, 7
        %v819 = vsub.s32 0, %v818
        %v820 = vrot.slane %v815, %v819
        %v822 = vadd.f32 %v814, %v820
        %v823 = vmax.f32 %v822, 0.0
        %v824 = vld [vmem:[#allocation5] sm:$0xff]
        %v825 = vld [vmem:[#allocation5 + $0x8] sm:$0xff]
        %v826 = vld [vmem:[#allocation5 + $0x10] sm:$0xff]
        %v827 = vld [vmem:[#allocation5 + $0x18] sm:$0xff]
        %v828 = vld [vmem:[#allocation5 + $0x20] sm:$0xff]
        %v829 = vld [vmem:[#allocation5 + $0x28] sm:$0xff]
        %v830 = vld [vmem:[#allocation5 + $0x30] sm:$0xff]
        %v831 = vld [vmem:[#allocation5 + $0x38] sm:$0xff]
        %v832 = vld [vmem:[#allocation5 + $0x40] sm:$0xff]
        %v833 = vld [vmem:[#allocation5 + $0x48] sm:$0xff]
        %v834 = vld [vmem:[#allocation5 + $0x50] sm:$0xff]
        %v835 = vld [vmem:[#allocation5 + $0x58] sm:$0xff]
        %v836 = vld [vmem:[#allocation5 + $0x60] sm:$0xff]
        %v837 = vld [vmem:[#allocation5 + $0x68] sm:$0xff]
        %v838 = vld [vmem:[#allocation5 + $0x70] sm:$0xff]
        %v839 = vld [vmem:[#allocation5 + $0x78] sm:$0xff]
        %v840 = vld [vmem:[#allocation5 + $0x80] sm:$0xff]
        %v841 = vld [vmem:[#allocation5 + $0x88] sm:$0xff]
        %v842 = vld [vmem:[#allocation5 + $0x90] sm:$0xff]
        %v843 = vld [vmem:[#allocation5 + $0x98] sm:$0xff]
        %v844 = vld [vmem:[#allocation5 + $0xa0] sm:$0xff]
        %v845 = vld [vmem:[#allocation5 + $0xa8] sm:$0xff]
        %v846 = vld [vmem:[#allocation5 + $0xb0] sm:$0xff]
        %v847 = vld [vmem:[#allocation5 + $0xb8] sm:$0xff]
        %v848 = vld [vmem:[#allocation5 + $0xc0] sm:$0xff]
        %v849 = vld [vmem:[#allocation5 + $0xc8] sm:$0xff]
        %v850 = vld [vmem:[#allocation5 + $0xd0] sm:$0xff]
        %v851 = vld [vmem:[#allocation5 + $0xd8] sm:$0xff]
        %v852 = vld [vmem:[#allocation5 + $0xe0] sm:$0xff]
        %v853 = vld [vmem:[#allocation5 + $0xe8] sm:$0xff]
        %v854 = vld [vmem:[#allocation5 + $0xf0] sm:$0xff]
        %v855 = vld [vmem:[#allocation5 + $0xf8] sm:$0xff]
        %v856 = vld [vmem:[#allocation5 + $0x100] sm:$0xff]
        %v857 = vld [vmem:[#allocation5 + $0x108] sm:$0xff]
        %v858 = vld [vmem:[#allocation5 + $0x110] sm:$0xff]
        %v859 = vld [vmem:[#allocation5 + $0x118] sm:$0xff]
        %v860 = vld [vmem:[#allocation5 + $0x120] sm:$0xff]
        %v861 = vld [vmem:[#allocation5 + $0x128] sm:$0xff]
        %v862 = vld [vmem:[#allocation5 + $0x130] sm:$0xff]
        %v863 = vld [vmem:[#allocation5 + $0x138] sm:$0xff]
        %v864 = vld [vmem:[#allocation5 + $0x140] sm:$0xff]
        %v865 = vld [vmem:[#allocation5 + $0x148] sm:$0xff]
        %v866 = vld [vmem:[#allocation5 + $0x150] sm:$0xff]
        %v867 = vld [vmem:[#allocation5 + $0x158] sm:$0xff]
        %v868 = vld [vmem:[#allocation5 + $0x160] sm:$0xff]
        %v869 = vld [vmem:[#allocation5 + $0x168] sm:$0xff]
        %v870 = vld [vmem:[#allocation5 + $0x170] sm:$0xff]
        %v871 = vld [vmem:[#allocation5 + $0x178] sm:$0xff]
        %872 = vmatprep.subr.mxu0 %v870
        %873 = vmatpush1.msra.mxu0 %v869
        %874 = vmatprep.subr.mxu0 %v867
        %875 = vmatpush1.msra.mxu0 %v866
        %876 = vmatprep.subr.mxu0 %v864
        %877 = vmatpush1.msra.mxu0 %v863
        %878 = vmatprep.subr.mxu0 %v861
        %879 = vmatpush1.msra.mxu0 %v860
        %880 = vmatprep.subr.mxu0 %v858
        %881 = vmatpush1.msra.mxu0 %v857
        %882 = vmatprep.subr.mxu0 %v855
        %883 = vmatpush1.msra.mxu0 %v854
        %884 = vmatprep.subr.mxu0 %v852
        %885 = vmatpush1.msra.mxu0 %v851
        %886 = vmatprep.subr.mxu0 %v849
        %887 = vmatpush1.msra.mxu0 %v848
        %888 = vmatprep.subr.mxu0 %v846
        %889 = vmatpush1.msra.mxu0 %v845
        %890 = vmatprep.subr.mxu0 %v843
        %891 = vmatpush1.msra.mxu0 %v842
        %892 = vmatprep.subr.mxu0 %v840
        %893 = vmatpush1.msra.mxu0 %v839
        %894 = vmatprep.subr.mxu0 %v837
        %895 = vmatpush1.msra.mxu0 %v836
        %896 = vmatprep.subr.mxu0 %v834
        %897 = vmatpush1.msra.mxu0 %v833
        %898 = vmatprep.subr.mxu0 %v831
        %899 = vmatpush1.msra.mxu0 %v830
        %900 = vmatprep.subr.mxu0 %v828
        %901 = vmatpush1.msra.mxu0 %v827
        %902 = vmatprep.subr.mxu0 %v825
        %903 = vmatpush1.msra.mxu0 %v824
        %904 = vmatprep.subr.mxu0 0.0
        %905 = vmatpush2.msra.mxu0 0.0
        %906 = vmatprep.subr.mxu0 0.0
        %907 = vmatpush2.msra.mxu0 0.0
        %908 = vmatprep.subr.mxu0 0.0
        %909 = vmatpush2.msra.mxu0 0.0
        %910 = vmatprep.subr.mxu0 0.0
        %911 = vmatpush2.msra.mxu0 0.0
        %912 = vmatprep.subr.mxu0 0.0
        %913 = vmatpush2.msra.mxu0 0.0
        %914 = vmatprep.subr.mxu0 0.0
        %915 = vmatpush2.msra.mxu0 0.0
        %916 = vmatprep.subr.mxu0 0.0
        %917 = vmatpush2.msra.mxu0 0.0
        %918 = vmatprep.subr.mxu0 0.0
        %919 = vmatpush2.msra.mxu0 0.0
        %920 = vmatprep.subr.mxu0 0.0
        %921 = vmatpush2.msra.mxu0 0.0
        %922 = vmatprep.subr.mxu0 0.0
        %923 = vmatpush2.msra.mxu0 0.0
        %924 = vmatprep.subr.mxu0 0.0
        %925 = vmatpush2.msra.mxu0 0.0
        %926 = vmatprep.subr.mxu0 0.0
        %927 = vmatpush2.msra.mxu0 0.0
        %928 = vmatprep.subr.mxu0 0.0
        %929 = vmatpush2.msra.mxu0 0.0
        %930 = vmatprep.subr.mxu0 0.0
        %931 = vmatpush2.msra.mxu0 0.0
        %932 = vmatprep.subr.mxu0 0.0
        %933 = vmatpush2.msra.mxu0 0.0
        %934 = vmatprep.subr.mxu0 0.0
        %935 = vmatpush2.msra.mxu0 0.0
        %936 = vmatprep.mubr.f32.mxu0 0.0
        %937 = vmatmul.mubr.f32.gmra.mxu0 %v823
        %v938 = vpop.f32.mrf.mxu0
        %v939 = vadd.f32 0.0, %v938
        %v940 = vpop.f32.mrf.mxu0
        %v941 = vadd.f32 0.0, %v940
        %942 = vdwg.mxu0
        %943 = vmatprep.subr.mxu0 0.0
        %944 = vmatpush1.msra.mxu0 %v871
        %945 = vmatprep.subr.mxu0 0.0
        %946 = vmatpush1.msra.mxu0 %v868
        %947 = vmatprep.subr.mxu0 0.0
        %948 = vmatpush1.msra.mxu0 %v865
        %949 = vmatprep.subr.mxu0 0.0
        %950 = vmatpush1.msra.mxu0 %v862
        %951 = vmatprep.subr.mxu0 0.0
        %952 = vmatpush1.msra.mxu0 %v859
        %953 = vmatprep.subr.mxu0 0.0
        %954 = vmatpush1.msra.mxu0 %v856
        %955 = vmatprep.subr.mxu0 0.0
        %956 = vmatpush1.msra.mxu0 %v853
        %957 = vmatprep.subr.mxu0 0.0
        %958 = vmatpush1.msra.mxu0 %v850
        %959 = vmatprep.subr.mxu0 0.0
        %960 = vmatpush1.msra.mxu0 %v847
        %961 = vmatprep.subr.mxu0 0.0
        %962 = vmatpush1.msra.mxu0 %v844
        %963 = vmatprep.subr.mxu0 0.0
        %964 = vmatpush1.msra.mxu0 %v841
        %965 = vmatprep.subr.mxu0 0.0
        %966 = vmatpush1.msra.mxu0 %v838
        %967 = vmatprep.subr.mxu0 0.0
        %968 = vmatpush1.msra.mxu0 %v835
        %969 = vmatprep.subr.mxu0 0.0
        %970 = vmatpush1.msra.mxu0 %v832
        %971 = vmatprep.subr.mxu0 0.0
        %972 = vmatpush1.msra.mxu0 %v829
        %973 = vmatprep.subr.mxu0 0.0
        %974 = vmatpush1.msra.mxu0 %v826
        %975 = vmatprep.subr.mxu0 0.0
        %976 = vmatpush2.msra.mxu0 0.0
        %977 = vmatprep.subr.mxu0 0.0
        %978 = vmatpush2.msra.mxu0 0.0
        %979 = vmatprep.subr.mxu0 0.0
        %980 = vmatpush2.msra.mxu0 0.0
        %981 = vmatprep.subr.mxu0 0.0
        %982 = vmatpush2.msra.mxu0 0.0
        %983 = vmatprep.subr.mxu0 0.0
        %984 = vmatpush2.msra.mxu0 0.0
        %985 = vmatprep.subr.mxu0 0.0
        %986 = vmatpush2.msra.mxu0 0.0
        %987 = vmatprep.subr.mxu0 0.0
        %988 = vmatpush2.msra.mxu0 0.0
        %989 = vmatprep.subr.mxu0 0.0
        %990 = vmatpush2.msra.mxu0 0.0
        %991 = vmatprep.subr.mxu0 0.0
        %992 = vmatpush2.msra.mxu0 0.0
        %993 = vmatprep.subr.mxu0 0.0
        %994 = vmatpush2.msra.mxu0 0.0
        %995 = vmatprep.subr.mxu0 0.0
        %996 = vmatpush2.msra.mxu0 0.0
        %997 = vmatprep.subr.mxu0 0.0
        %998 = vmatpush2.msra.mxu0 0.0
        %999 = vmatprep.subr.mxu0 0.0
        %1000 = vmatpush2.msra.mxu0 0.0
        %1001 = vmatprep.subr.mxu0 0.0
        %1002 = vmatpush2.msra.mxu0 0.0
        %1003 = vmatprep.subr.mxu0 0.0
        %1004 = vmatpush2.msra.mxu0 0.0
        %1005 = vmatprep.subr.mxu0 0.0
        %1006 = vmatpush2.msra.mxu0 0.0
        %1007 = vmatprep.mubr.f32.mxu0 0.0
        %1008 = vmatmul.mubr.f32.gmra.mxu0 %v823
        %v1009 = vpop.f32.mrf.mxu0
        %v1010 = vadd.f32 0.0, %v1009
        %v1011 = vpop.f32.mrf.mxu0
        %1012 = vdwg.mxu0
        %v1013 = vld [vmem:[%s6] sm:$0xff]
        %v1014 = vld [vmem:[%s6 + $0x8] sm:$0xff]
        %s1015 = scalar_lea.vmem %s6, 16
        %v1016 = vld [vmem:[%s1015] sm:$0xff]
        %v1017 = vld [vmem:[%s1015 + $0x8] sm:$0xff]
        %v1019 = vsel %vm592, %v1016, 0
        %v1022 = vsel %vm592, %v1017, 0
        %1024 = vmatprep.subr.mxu0 0.0
        %1025 = vmatpush1.msra.mxu0 0.0
        %1026 = vmatprep.subr.mxu0 0.0
        %1027 = vmatpush1.msra.mxu0 0.0
        %1028 = vmatprep.subr.mxu0 0.0
        %1029 = vmatpush1.msra.mxu0 0.0
        %1030 = vmatprep.subr.mxu0 0.0
        %1031 = vmatpush1.msra.mxu0 0.0
        %1032 = vmatprep.subr.mxu0 0.0
        %1033 = vmatpush1.msra.mxu0 0.0
        %1034 = vmatprep.subr.mxu0 0.0
        %1035 = vmatpush1.msra.mxu0 0.0
        %1036 = vmatprep.subr.mxu0 0.0
        %1037 = vmatpush1.msra.mxu0 0.0
        %1038 = vmatprep.subr.mxu0 0.0
        %1039 = vmatpush1.msra.mxu0 0.0
        %1040 = vmatprep.subr.mxu0 0.0
        %1041 = vmatpush1.msra.mxu0 0.0
        %1042 = vmatprep.subr.mxu0 0.0
        %1043 = vmatpush1.msra.mxu0 0.0
        %1044 = vmatprep.subr.mxu0 0.0
        %1045 = vmatpush1.msra.mxu0 0.0
        %1046 = vmatprep.subr.mxu0 0.0
        %1047 = vmatpush1.msra.mxu0 0.0
        %1048 = vmatprep.subr.mxu0 0.0
        %1049 = vmatpush1.msra.mxu0 0.0
        %1050 = vmatprep.subr.mxu0 0.0
        %1051 = vmatpush1.msra.mxu0 0.0
        %1052 = vmatprep.subr.mxu0 0.0
        %1053 = vmatpush1.msra.mxu0 0.0
        %1054 = vmatprep.subr.mxu0 0.0
        %1055 = vmatpush1.msra.mxu0 %v941
        %1056 = vmatprep.subr.mxu0 0.0
        %1057 = vmatpush2.msra.mxu0 0.0
        %1058 = vmatprep.subr.mxu0 0.0
        %1059 = vmatpush2.msra.mxu0 0.0
        %1060 = vmatprep.subr.mxu0 0.0
        %1061 = vmatpush2.msra.mxu0 0.0
        %1062 = vmatprep.subr.mxu0 0.0
        %1063 = vmatpush2.msra.mxu0 0.0
        %1064 = vmatprep.subr.mxu0 0.0
        %1065 = vmatpush2.msra.mxu0 0.0
        %1066 = vmatprep.subr.mxu0 0.0
        %1067 = vmatpush2.msra.mxu0 0.0
        %1068 = vmatprep.subr.mxu0 0.0
        %1069 = vmatpush2.msra.mxu0 0.0
        %1070 = vmatprep.subr.mxu0 0.0
        %1071 = vmatpush2.msra.mxu0 0.0
        %1072 = vmatprep.subr.mxu0 0.0
        %1073 = vmatpush2.msra.mxu0 0.0
        %1074 = vmatprep.subr.mxu0 0.0
        %1075 = vmatpush2.msra.mxu0 0.0
        %1076 = vmatprep.subr.mxu0 0.0
        %1077 = vmatpush2.msra.mxu0 0.0
        %1078 = vmatprep.subr.mxu0 0.0
        %1079 = vmatpush2.msra.mxu0 0.0
        %1080 = vmatprep.subr.mxu0 0.0
        %1081 = vmatpush2.msra.mxu0 0.0
        %1082 = vmatprep.subr.mxu0 0.0
        %1083 = vmatpush2.msra.mxu0 0.0
        %1084 = vmatprep.subr.mxu0 0.0
        %1085 = vmatpush2.msra.mxu0 0.0
        %1086 = vmatprep.subr.mxu0 0.0
        %1087 = vmatpush2.msra.mxu0 0.0
        %1088 = vmatprep.mubr.f32.mxu0 0.0
        %1089 = vmatmul.mubr.f32.gmra.mxu0 %v1019
        %v1090 = vpop.f32.mrf.mxu0
        %v1091 = vadd.f32 0.0, %v1090
        %v1092 = vpop.f32.mrf.mxu0
        %1093 = vmatprep.mubr.f32.mxu0 0.0
        %1094 = vmatmul.mubr.f32.gmra.mxu0 %v1022
        %v1095 = vpop.f32.mrf.mxu0
        %v1096 = vadd.f32 0.0, %v1095
        %v1097 = vpop.f32.mrf.mxu0
        %1098 = vdwg.mxu0
        %v1100 = vsel %vm592, %v1013, 0
        %v1103 = vsel %vm592, %v1014, 0
        %1105 = vmatprep.subr.mxu0 0.0
        %1106 = vmatpush1.msra.mxu0 0.0
        %1107 = vmatprep.subr.mxu0 0.0
        %1108 = vmatpush1.msra.mxu0 0.0
        %1109 = vmatprep.subr.mxu0 0.0
        %1110 = vmatpush1.msra.mxu0 0.0
        %1111 = vmatprep.subr.mxu0 0.0
        %1112 = vmatpush1.msra.mxu0 0.0
        %1113 = vmatprep.subr.mxu0 0.0
        %1114 = vmatpush1.msra.mxu0 0.0
        %1115 = vmatprep.subr.mxu0 0.0
        %1116 = vmatpush1.msra.mxu0 0.0
        %1117 = vmatprep.subr.mxu0 0.0
        %1118 = vmatpush1.msra.mxu0 0.0
        %1119 = vmatprep.subr.mxu0 0.0
        %1120 = vmatpush1.msra.mxu0 0.0
        %1121 = vmatprep.subr.mxu0 0.0
        %1122 = vmatpush1.msra.mxu0 0.0
        %1123 = vmatprep.subr.mxu0 0.0
        %1124 = vmatpush1.msra.mxu0 0.0
        %1125 = vmatprep.subr.mxu0 0.0
        %1126 = vmatpush1.msra.mxu0 0.0
        %1127 = vmatprep.subr.mxu0 0.0
        %1128 = vmatpush1.msra.mxu0 0.0
        %1129 = vmatprep.subr.mxu0 0.0
        %1130 = vmatpush1.msra.mxu0 0.0
        %1131 = vmatprep.subr.mxu0 0.0
        %1132 = vmatpush1.msra.mxu0 0.0
        %1133 = vmatprep.subr.mxu0 0.0
        %1134 = vmatpush1.msra.mxu0 0.0
        %1135 = vmatprep.subr.mxu0 0.0
        %1136 = vmatpush1.msra.mxu0 %v939
        %1137 = vmatprep.subr.mxu0 0.0
        %1138 = vmatpush2.msra.mxu0 0.0
        %1139 = vmatprep.subr.mxu0 0.0
        %1140 = vmatpush2.msra.mxu0 0.0
        %1141 = vmatprep.subr.mxu0 0.0
        %1142 = vmatpush2.msra.mxu0 0.0
        %1143 = vmatprep.subr.mxu0 0.0
        %1144 = vmatpush2.msra.mxu0 0.0
        %1145 = vmatprep.subr.mxu0 0.0
        %1146 = vmatpush2.msra.mxu0 0.0
        %1147 = vmatprep.subr.mxu0 0.0
        %1148 = vmatpush2.msra.mxu0 0.0
        %1149 = vmatprep.subr.mxu0 0.0
        %1150 = vmatpush2.msra.mxu0 0.0
        %1151 = vmatprep.subr.mxu0 0.0
        %1152 = vmatpush2.msra.mxu0 0.0
        %1153 = vmatprep.subr.mxu0 0.0
        %1154 = vmatpush2.msra.mxu0 0.0
        %1155 = vmatprep.subr.mxu0 0.0
        %1156 = vmatpush2.msra.mxu0 0.0
        %1157 = vmatprep.subr.mxu0 0.0
        %1158 = vmatpush2.msra.mxu0 0.0
        %1159 = vmatprep.subr.mxu0 0.0
        %1160 = vmatpush2.msra.mxu0 0.0
        %1161 = vmatprep.subr.mxu0 0.0
        %1162 = vmatpush2.msra.mxu0 0.0
        %1163 = vmatprep.subr.mxu0 0.0
        %1164 = vmatpush2.msra.mxu0 0.0
        %1165 = vmatprep.subr.mxu0 0.0
        %1166 = vmatpush2.msra.mxu0 0.0
        %1167 = vmatprep.subr.mxu0 0.0
        %1168 = vmatpush2.msra.mxu0 0.0
        %1169 = vmatprep.mubr.f32.mxu0 0.0
        %1170 = vmatmul.mubr.f32.gmra.mxu0 %v1100
        %v1171 = vpop.f32.mrf.mxu0
        %v1172 = vadd.f32 %v1091, %v1171
        %v1173 = vpop.f32.mrf.mxu0
        %1174 = vmatprep.mubr.f32.mxu0 0.0
        %1175 = vmatmul.mubr.f32.gmra.mxu0 %v1103
        %v1176 = vpop.f32.mrf.mxu0
        %v1177 = vadd.f32 %v1096, %v1176
        %v1178 = vpop.f32.mrf.mxu0
        %1179 = vdwg.mxu0
        %s1180 = scalar_lea.vmem %s6, 32
        %v1181 = vld [vmem:[%s1180] sm:$0xff]
        %v1182 = vld [vmem:[%s1180 + $0x8] sm:$0xff]
        %v1184 = vsel %vm592, %v1181, 0
        %v1187 = vsel %vm592, %v1182, 0
        %1189 = vmatprep.subr.mxu0 0.0
        %1190 = vmatpush1.msra.mxu0 0.0
        %1191 = vmatprep.subr.mxu0 0.0
        %1192 = vmatpush1.msra.mxu0 0.0
        %1193 = vmatprep.subr.mxu0 0.0
        %1194 = vmatpush1.msra.mxu0 0.0
        %1195 = vmatprep.subr.mxu0 0.0
        %1196 = vmatpush1.msra.mxu0 0.0
        %1197 = vmatprep.subr.mxu0 0.0
        %1198 = vmatpush1.msra.mxu0 0.0
        %1199 = vmatprep.subr.mxu0 0.0
        %1200 = vmatpush1.msra.mxu0 0.0
        %1201 = vmatprep.subr.mxu0 0.0
        %1202 = vmatpush1.msra.mxu0 0.0
        %1203 = vmatprep.subr.mxu0 0.0
        %1204 = vmatpush1.msra.mxu0 0.0
        %1205 = vmatprep.subr.mxu0 0.0
        %1206 = vmatpush1.msra.mxu0 0.0
        %1207 = vmatprep.subr.mxu0 0.0
        %1208 = vmatpush1.msra.mxu0 0.0
        %1209 = vmatprep.subr.mxu0 0.0
        %1210 = vmatpush1.msra.mxu0 0.0
        %1211 = vmatprep.subr.mxu0 0.0
        %1212 = vmatpush1.msra.mxu0 0.0
        %1213 = vmatprep.subr.mxu0 0.0
        %1214 = vmatpush1.msra.mxu0 0.0
        %1215 = vmatprep.subr.mxu0 0.0
        %1216 = vmatpush1.msra.mxu0 0.0
        %1217 = vmatprep.subr.mxu0 0.0
        %1218 = vmatpush1.msra.mxu0 0.0
        %1219 = vmatprep.subr.mxu0 0.0
        %1220 = vmatpush1.msra.mxu0 %v1010
        %1221 = vmatprep.subr.mxu0 0.0
        %1222 = vmatpush2.msra.mxu0 0.0
        %1223 = vmatprep.subr.mxu0 0.0
        %1224 = vmatpush2.msra.mxu0 0.0
        %1225 = vmatprep.subr.mxu0 0.0
        %1226 = vmatpush2.msra.mxu0 0.0
        %1227 = vmatprep.subr.mxu0 0.0
        %1228 = vmatpush2.msra.mxu0 0.0
        %1229 = vmatprep.subr.mxu0 0.0
        %1230 = vmatpush2.msra.mxu0 0.0
        %1231 = vmatprep.subr.mxu0 0.0
        %1232 = vmatpush2.msra.mxu0 0.0
        %1233 = vmatprep.subr.mxu0 0.0
        %1234 = vmatpush2.msra.mxu0 0.0
        %1235 = vmatprep.subr.mxu0 0.0
        %1236 = vmatpush2.msra.mxu0 0.0
        %1237 = vmatprep.subr.mxu0 0.0
        %1238 = vmatpush2.msra.mxu0 0.0
        %1239 = vmatprep.subr.mxu0 0.0
        %1240 = vmatpush2.msra.mxu0 0.0
        %1241 = vmatprep.subr.mxu0 0.0
        %1242 = vmatpush2.msra.mxu0 0.0
        %1243 = vmatprep.subr.mxu0 0.0
        %1244 = vmatpush2.msra.mxu0 0.0
        %1245 = vmatprep.subr.mxu0 0.0
        %1246 = vmatpush2.msra.mxu0 0.0
        %1247 = vmatprep.subr.mxu0 0.0
        %1248 = vmatpush2.msra.mxu0 0.0
        %1249 = vmatprep.subr.mxu0 0.0
        %1250 = vmatpush2.msra.mxu0 0.0
        %1251 = vmatprep.subr.mxu0 0.0
        %1252 = vmatpush2.msra.mxu0 0.0
        %1253 = vmatprep.mubr.f32.mxu0 0.0
        %1254 = vmatmul.mubr.f32.gmra.mxu0 %v1184
        %v1255 = vpop.f32.mrf.mxu0
        %v1256 = vadd.f32 0.0, %v1255
        %v1257 = vpop.f32.mrf.mxu0
        %1258 = vmatprep.mubr.f32.mxu0 0.0
        %1259 = vmatmul.mubr.f32.gmra.mxu0 %v1187
        %v1260 = vpop.f32.mrf.mxu0
        %v1261 = vadd.f32 0.0, %v1260
        %v1262 = vpop.f32.mrf.mxu0
        %1263 = vdwg.mxu0
        %v1264 = vadd.f32 %v1172, %v1256
        %v1265 = vadd.f32 %v1177, %v1261
        %v1266 = vld [vmem:[%s5] sm:$0x1]
        %v1268 = vlaneseq
        %v1269 = vshrl.u32 %v1268, 7
        %v1270 = vsub.s32 0, %v1269
        %v1271 = vrot.slane %v1266, %v1270
        %v1273 = vadd.f32 %v1264, %v1271
        %v1274 = vadd.f32 %v1265, %v1271
        %v1275 = vmax.f32 %v1273, 0.0
        %v1276 = vmax.f32 %v1274, 0.0
        %v1277 = vld [vmem:[#allocation7] sm:$0xff]
        %v1278 = vld [vmem:[#allocation7 + $0x8] sm:$0xff]
        %v1279 = vld [vmem:[#allocation7 + $0x10] sm:$0xff]
        %v1280 = vld [vmem:[#allocation7 + $0x18] sm:$0xff]
        %v1281 = vld [vmem:[#allocation7 + $0x20] sm:$0xff]
        %v1282 = vld [vmem:[#allocation7 + $0x28] sm:$0xff]
        %v1283 = vld [vmem:[#allocation7 + $0x30] sm:$0xff]
        %v1284 = vld [vmem:[#allocation7 + $0x38] sm:$0xff]
        %v1285 = vld [vmem:[#allocation7 + $0x40] sm:$0xff]
        %v1286 = vld [vmem:[#allocation7 + $0x48] sm:$0xff]
        %v1287 = vld [vmem:[#allocation7 + $0x50] sm:$0xff]
        %v1288 = vld [vmem:[#allocation7 + $0x58] sm:$0xff]
        %v1289 = vld [vmem:[#allocation7 + $0x60] sm:$0xff]
        %v1290 = vld [vmem:[#allocation7 + $0x68] sm:$0xff]
        %v1291 = vld [vmem:[#allocation7 + $0x70] sm:$0xff]
        %v1292 = vld [vmem:[#allocation7 + $0x78] sm:$0xff]
        %v1293 = vld [vmem:[#allocation7 + $0x80] sm:$0xff]
        %v1294 = vld [vmem:[#allocation7 + $0x88] sm:$0xff]
        %v1295 = vld [vmem:[#allocation7 + $0x90] sm:$0xff]
        %v1296 = vld [vmem:[#allocation7 + $0x98] sm:$0xff]
        %v1297 = vld [vmem:[#allocation7 + $0xa0] sm:$0xff]
        %v1298 = vld [vmem:[#allocation7 + $0xa8] sm:$0xff]
        %v1299 = vld [vmem:[#allocation7 + $0xb0] sm:$0xff]
        %v1300 = vld [vmem:[#allocation7 + $0xb8] sm:$0xff]
        %v1301 = vld [vmem:[#allocation7 + $0xc0] sm:$0xff]
        %v1302 = vld [vmem:[#allocation7 + $0xc8] sm:$0xff]
        %v1303 = vld [vmem:[#allocation7 + $0xd0] sm:$0xff]
        %v1304 = vld [vmem:[#allocation7 + $0xd8] sm:$0xff]
        %v1305 = vld [vmem:[#allocation7 + $0xe0] sm:$0xff]
        %v1306 = vld [vmem:[#allocation7 + $0xe8] sm:$0xff]
        %v1307 = vld [vmem:[#allocation7 + $0xf0] sm:$0xff]
        %v1308 = vld [vmem:[#allocation7 + $0xf8] sm:$0xff]
        %v1309 = vld [vmem:[#allocation7 + $0x100] sm:$0xff]
        %v1310 = vld [vmem:[#allocation7 + $0x108] sm:$0xff]
        %v1311 = vld [vmem:[#allocation7 + $0x110] sm:$0xff]
        %v1312 = vld [vmem:[#allocation7 + $0x118] sm:$0xff]
        %v1313 = vld [vmem:[#allocation7 + $0x120] sm:$0xff]
        %v1314 = vld [vmem:[#allocation7 + $0x128] sm:$0xff]
        %v1315 = vld [vmem:[#allocation7 + $0x130] sm:$0xff]
        %v1316 = vld [vmem:[#allocation7 + $0x138] sm:$0xff]
        %v1317 = vld [vmem:[#allocation7 + $0x140] sm:$0xff]
        %v1318 = vld [vmem:[#allocation7 + $0x148] sm:$0xff]
        %v1319 = vld [vmem:[#allocation7 + $0x150] sm:$0xff]
        %v1320 = vld [vmem:[#allocation7 + $0x158] sm:$0xff]
        %v1321 = vld [vmem:[#allocation7 + $0x160] sm:$0xff]
        %v1322 = vld [vmem:[#allocation7 + $0x168] sm:$0xff]
        %v1323 = vld [vmem:[#allocation7 + $0x170] sm:$0xff]
        %v1324 = vld [vmem:[#allocation7 + $0x178] sm:$0xff]
        %1325 = vmatprep.subr.mxu0 %v1323
        %1326 = vmatpush1.msra.mxu0 %v1322
        %1327 = vmatprep.subr.mxu0 %v1320
        %1328 = vmatpush1.msra.mxu0 %v1319
        %1329 = vmatprep.subr.mxu0 %v1317
        %1330 = vmatpush1.msra.mxu0 %v1316
        %1331 = vmatprep.subr.mxu0 %v1314
        %1332 = vmatpush1.msra.mxu0 %v1313
        %1333 = vmatprep.subr.mxu0 %v1311
        %1334 = vmatpush1.msra.mxu0 %v1310
        %1335 = vmatprep.subr.mxu0 %v1308
        %1336 = vmatpush1.msra.mxu0 %v1307
        %1337 = vmatprep.subr.mxu0 %v1305
        %1338 = vmatpush1.msra.mxu0 %v1304
        %1339 = vmatprep.subr.mxu0 %v1302
        %1340 = vmatpush1.msra.mxu0 %v1301
        %1341 = vmatprep.subr.mxu0 %v1299
        %1342 = vmatpush1.msra.mxu0 %v1298
        %1343 = vmatprep.subr.mxu0 %v1296
        %1344 = vmatpush1.msra.mxu0 %v1295
        %1345 = vmatprep.subr.mxu0 %v1293
        %1346 = vmatpush1.msra.mxu0 %v1292
        %1347 = vmatprep.subr.mxu0 %v1290
        %1348 = vmatpush1.msra.mxu0 %v1289
        %1349 = vmatprep.subr.mxu0 %v1287
        %1350 = vmatpush1.msra.mxu0 %v1286
        %1351 = vmatprep.subr.mxu0 %v1284
        %1352 = vmatpush1.msra.mxu0 %v1283
        %1353 = vmatprep.subr.mxu0 %v1281
        %1354 = vmatpush1.msra.mxu0 %v1280
        %1355 = vmatprep.subr.mxu0 %v1278
        %1356 = vmatpush1.msra.mxu0 %v1277
        %1357 = vmatprep.subr.mxu0 0.0
        %1358 = vmatpush2.msra.mxu0 0.0
        %1359 = vmatprep.subr.mxu0 0.0
        %1360 = vmatpush2.msra.mxu0 0.0
        %1361 = vmatprep.subr.mxu0 0.0
        %1362 = vmatpush2.msra.mxu0 0.0
        %1363 = vmatprep.subr.mxu0 0.0
        %1364 = vmatpush2.msra.mxu0 0.0
        %1365 = vmatprep.subr.mxu0 0.0
        %1366 = vmatpush2.msra.mxu0 0.0
        %1367 = vmatprep.subr.mxu0 0.0
        %1368 = vmatpush2.msra.mxu0 0.0
        %1369 = vmatprep.subr.mxu0 0.0
        %1370 = vmatpush2.msra.mxu0 0.0
        %1371 = vmatprep.subr.mxu0 0.0
        %1372 = vmatpush2.msra.mxu0 0.0
        %1373 = vmatprep.subr.mxu0 0.0
        %1374 = vmatpush2.msra.mxu0 0.0
        %1375 = vmatprep.subr.mxu0 0.0
        %1376 = vmatpush2.msra.mxu0 0.0
        %1377 = vmatprep.subr.mxu0 0.0
        %1378 = vmatpush2.msra.mxu0 0.0
        %1379 = vmatprep.subr.mxu0 0.0
        %1380 = vmatpush2.msra.mxu0 0.0
        %1381 = vmatprep.subr.mxu0 0.0
        %1382 = vmatpush2.msra.mxu0 0.0
        %1383 = vmatprep.subr.mxu0 0.0
        %1384 = vmatpush2.msra.mxu0 0.0
        %1385 = vmatprep.subr.mxu0 0.0
        %1386 = vmatpush2.msra.mxu0 0.0
        %1387 = vmatprep.subr.mxu0 0.0
        %1388 = vmatpush2.msra.mxu0 0.0
        %1389 = vmatprep.mubr.f32.mxu0 0.0
        %1390 = vmatmul.mubr.f32.gmra.mxu0 %v1275
        %v1391 = vpop.f32.mrf.mxu0
        %v1392 = vadd.f32 0.0, %v1391
        %v1393 = vpop.f32.mrf.mxu0
        %v1394 = vadd.f32 0.0, %v1393
        %1395 = vmatprep.mubr.f32.mxu0 0.0
        %1396 = vmatmul.mubr.f32.gmra.mxu0 %v1276
        %v1397 = vpop.f32.mrf.mxu0
        %v1398 = vadd.f32 0.0, %v1397
        %v1399 = vpop.f32.mrf.mxu0
        %v1400 = vadd.f32 0.0, %v1399
        %1401 = vdwg.mxu0
        %1402 = vmatprep.subr.mxu0 0.0
        %1403 = vmatpush1.msra.mxu0 %v1324
        %1404 = vmatprep.subr.mxu0 0.0
        %1405 = vmatpush1.msra.mxu0 %v1321
        %1406 = vmatprep.subr.mxu0 0.0
        %1407 = vmatpush1.msra.mxu0 %v1318
        %1408 = vmatprep.subr.mxu0 0.0
        %1409 = vmatpush1.msra.mxu0 %v1315
        %1410 = vmatprep.subr.mxu0 0.0
        %1411 = vmatpush1.msra.mxu0 %v1312
        %1412 = vmatprep.subr.mxu0 0.0
        %1413 = vmatpush1.msra.mxu0 %v1309
        %1414 = vmatprep.subr.mxu0 0.0
        %1415 = vmatpush1.msra.mxu0 %v1306
        %1416 = vmatprep.subr.mxu0 0.0
        %1417 = vmatpush1.msra.mxu0 %v1303
        %1418 = vmatprep.subr.mxu0 0.0
        %1419 = vmatpush1.msra.mxu0 %v1300
        %1420 = vmatprep.subr.mxu0 0.0
        %1421 = vmatpush1.msra.mxu0 %v1297
        %1422 = vmatprep.subr.mxu0 0.0
        %1423 = vmatpush1.msra.mxu0 %v1294
        %1424 = vmatprep.subr.mxu0 0.0
        %1425 = vmatpush1.msra.mxu0 %v1291
        %1426 = vmatprep.subr.mxu0 0.0
        %1427 = vmatpush1.msra.mxu0 %v1288
        %1428 = vmatprep.subr.mxu0 0.0
        %1429 = vmatpush1.msra.mxu0 %v1285
        %1430 = vmatprep.subr.mxu0 0.0
        %1431 = vmatpush1.msra.mxu0 %v1282
        %1432 = vmatprep.subr.mxu0 0.0
        %1433 = vmatpush1.msra.mxu0 %v1279
        %1434 = vmatprep.subr.mxu0 0.0
        %1435 = vmatpush2.msra.mxu0 0.0
        %1436 = vmatprep.subr.mxu0 0.0
        %1437 = vmatpush2.msra.mxu0 0.0
        %1438 = vmatprep.subr.mxu0 0.0
        %1439 = vmatpush2.msra.mxu0 0.0
        %1440 = vmatprep.subr.mxu0 0.0
        %1441 = vmatpush2.msra.mxu0 0.0
        %1442 = vmatprep.subr.mxu0 0.0
        %1443 = vmatpush2.msra.mxu0 0.0
        %1444 = vmatprep.subr.mxu0 0.0
        %1445 = vmatpush2.msra.mxu0 0.0
        %1446 = vmatprep.subr.mxu0 0.0
        %1447 = vmatpush2.msra.mxu0 0.0
        %1448 = vmatprep.subr.mxu0 0.0
        %1449 = vmatpush2.msra.mxu0 0.0
        %1450 = vmatprep.subr.mxu0 0.0
        %1451 = vmatpush2.msra.mxu0 0.0
        %1452 = vmatprep.subr.mxu0 0.0
        %1453 = vmatpush2.msra.mxu0 0.0
        %1454 = vmatprep.subr.mxu0 0.0
        %1455 = vmatpush2.msra.mxu0 0.0
        %1456 = vmatprep.subr.mxu0 0.0
        %1457 = vmatpush2.msra.mxu0 0.0
        %1458 = vmatprep.subr.mxu0 0.0
        %1459 = vmatpush2.msra.mxu0 0.0
        %1460 = vmatprep.subr.mxu0 0.0
        %1461 = vmatpush2.msra.mxu0 0.0
        %1462 = vmatprep.subr.mxu0 0.0
        %1463 = vmatpush2.msra.mxu0 0.0
        %1464 = vmatprep.subr.mxu0 0.0
        %1465 = vmatpush2.msra.mxu0 0.0
        %1466 = vmatprep.mubr.f32.mxu0 0.0
        %1467 = vmatmul.mubr.f32.gmra.mxu0 %v1275
        %v1468 = vpop.f32.mrf.mxu0
        %v1469 = vadd.f32 0.0, %v1468
        %v1470 = vpop.f32.mrf.mxu0
        %1471 = vmatprep.mubr.f32.mxu0 0.0
        %1472 = vmatmul.mubr.f32.gmra.mxu0 %v1276
        %v1473 = vpop.f32.mrf.mxu0
        %v1474 = vadd.f32 0.0, %v1473
        %v1475 = vpop.f32.mrf.mxu0
        %1476 = vdwg.mxu0
        %v1477 = vld [vmem:[%s9] sm:$0xff]
        %v1478 = vld [vmem:[%s9 + $0x8] sm:$0xff]
        %v1479 = vld [vmem:[%s9 + $0x10] sm:$0xff]
        %s1480 = scalar_lea.vmem %s9, 24
        %v1481 = vld [vmem:[%s1480] sm:$0xff]
        %v1482 = vld [vmem:[%s1480 + $0x8] sm:$0xff]
        %v1483 = vld [vmem:[%s1480 + $0x10] sm:$0xff]
        %vm1484 = vcmask 130048
        %v1486 = vsel %vm1484, %v1481, 0
        %v1489 = vsel %vm1484, %v1482, 0
        %v1492 = vsel %vm1484, %v1483, 0
        %1494 = vmatprep.subr.mxu0 0.0
        %1495 = vmatpush1.msra.mxu0 0.0
        %1496 = vmatprep.subr.mxu0 0.0
        %1497 = vmatpush1.msra.mxu0 0.0
        %1498 = vmatprep.subr.mxu0 0.0
        %1499 = vmatpush1.msra.mxu0 0.0
        %1500 = vmatprep.subr.mxu0 0.0
        %1501 = vmatpush1.msra.mxu0 0.0
        %1502 = vmatprep.subr.mxu0 0.0
        %1503 = vmatpush1.msra.mxu0 0.0
        %1504 = vmatprep.subr.mxu0 0.0
        %1505 = vmatpush1.msra.mxu0 0.0
        %1506 = vmatprep.subr.mxu0 0.0
        %1507 = vmatpush1.msra.mxu0 0.0
        %1508 = vmatprep.subr.mxu0 0.0
        %1509 = vmatpush1.msra.mxu0 0.0
        %1510 = vmatprep.subr.mxu0 0.0
        %1511 = vmatpush1.msra.mxu0 0.0
        %1512 = vmatprep.subr.mxu0 0.0
        %1513 = vmatpush1.msra.mxu0 0.0
        %1514 = vmatprep.subr.mxu0 0.0
        %1515 = vmatpush1.msra.mxu0 0.0
        %1516 = vmatprep.subr.mxu0 0.0
        %1517 = vmatpush1.msra.mxu0 0.0
        %1518 = vmatprep.subr.mxu0 0.0
        %1519 = vmatpush1.msra.mxu0 0.0
        %1520 = vmatprep.subr.mxu0 0.0
        %1521 = vmatpush1.msra.mxu0 0.0
        %1522 = vmatprep.subr.mxu0 0.0
        %1523 = vmatpush1.msra.mxu0 %v1400
        %1524 = vmatprep.subr.mxu0 0.0
        %1525 = vmatpush1.msra.mxu0 %v1394
        %1526 = vmatprep.subr.mxu0 0.0
        %1527 = vmatpush2.msra.mxu0 0.0
        %1528 = vmatprep.subr.mxu0 0.0
        %1529 = vmatpush2.msra.mxu0 0.0
        %1530 = vmatprep.subr.mxu0 0.0
        %1531 = vmatpush2.msra.mxu0 0.0
        %1532 = vmatprep.subr.mxu0 0.0
        %1533 = vmatpush2.msra.mxu0 0.0
        %1534 = vmatprep.subr.mxu0 0.0
        %1535 = vmatpush2.msra.mxu0 0.0
        %1536 = vmatprep.subr.mxu0 0.0
        %1537 = vmatpush2.msra.mxu0 0.0
        %1538 = vmatprep.subr.mxu0 0.0
        %1539 = vmatpush2.msra.mxu0 0.0
        %1540 = vmatprep.subr.mxu0 0.0
        %1541 = vmatpush2.msra.mxu0 0.0
        %1542 = vmatprep.subr.mxu0 0.0
        %1543 = vmatpush2.msra.mxu0 0.0
        %1544 = vmatprep.subr.mxu0 0.0
        %1545 = vmatpush2.msra.mxu0 0.0
        %1546 = vmatprep.subr.mxu0 0.0
        %1547 = vmatpush2.msra.mxu0 0.0
        %1548 = vmatprep.subr.mxu0 0.0
        %1549 = vmatpush2.msra.mxu0 0.0
        %1550 = vmatprep.subr.mxu0 0.0
        %1551 = vmatpush2.msra.mxu0 0.0
        %1552 = vmatprep.subr.mxu0 0.0
        %1553 = vmatpush2.msra.mxu0 0.0
        %1554 = vmatprep.subr.mxu0 0.0
        %1555 = vmatpush2.msra.mxu0 0.0
        %1556 = vmatprep.subr.mxu0 0.0
        %1557 = vmatpush2.msra.mxu0 0.0
        %1558 = vmatprep.mubr.f32.mxu0 0.0
        %1559 = vmatmul.mubr.f32.gmra.mxu0 %v1486
        %v1560 = vpop.f32.mrf.mxu0
        %v1561 = vadd.f32 0.0, %v1560
        %v1562 = vpop.f32.mrf.mxu0
        %1563 = vmatprep.mubr.f32.mxu0 0.0
        %1564 = vmatmul.mubr.f32.gmra.mxu0 %v1489
        %v1565 = vpop.f32.mrf.mxu0
        %v1566 = vadd.f32 0.0, %v1565
        %v1567 = vpop.f32.mrf.mxu0
        %1568 = vmatprep.mubr.f32.mxu0 0.0
        %1569 = vmatmul.mubr.f32.gmra.mxu0 %v1492
        %v1570 = vpop.f32.mrf.mxu0
        %v1571 = vadd.f32 0.0, %v1570
        %v1572 = vpop.f32.mrf.mxu0
        %1573 = vdwg.mxu0
        %v1575 = vsel %vm1484, %v1477, 0
        %v1578 = vsel %vm1484, %v1478, 0
        %v1581 = vsel %vm1484, %v1479, 0
        %1583 = vmatprep.subr.mxu0 0.0
        %1584 = vmatpush1.msra.mxu0 0.0
        %1585 = vmatprep.subr.mxu0 0.0
        %1586 = vmatpush1.msra.mxu0 0.0
        %1587 = vmatprep.subr.mxu0 0.0
        %1588 = vmatpush1.msra.mxu0 0.0
        %1589 = vmatprep.subr.mxu0 0.0
        %1590 = vmatpush1.msra.mxu0 0.0
        %1591 = vmatprep.subr.mxu0 0.0
        %1592 = vmatpush1.msra.mxu0 0.0
        %1593 = vmatprep.subr.mxu0 0.0
        %1594 = vmatpush1.msra.mxu0 0.0
        %1595 = vmatprep.subr.mxu0 0.0
        %1596 = vmatpush1.msra.mxu0 0.0
        %1597 = vmatprep.subr.mxu0 0.0
        %1598 = vmatpush1.msra.mxu0 0.0
        %1599 = vmatprep.subr.mxu0 0.0
        %1600 = vmatpush1.msra.mxu0 0.0
        %1601 = vmatprep.subr.mxu0 0.0
        %1602 = vmatpush1.msra.mxu0 0.0
        %1603 = vmatprep.subr.mxu0 0.0
        %1604 = vmatpush1.msra.mxu0 0.0
        %1605 = vmatprep.subr.mxu0 0.0
        %1606 = vmatpush1.msra.mxu0 0.0
        %1607 = vmatprep.subr.mxu0 0.0
        %1608 = vmatpush1.msra.mxu0 0.0
        %1609 = vmatprep.subr.mxu0 0.0
        %1610 = vmatpush1.msra.mxu0 0.0
        %1611 = vmatprep.subr.mxu0 0.0
        %1612 = vmatpush1.msra.mxu0 %v1398
        %1613 = vmatprep.subr.mxu0 0.0
        %1614 = vmatpush1.msra.mxu0 %v1392
        %1615 = vmatprep.subr.mxu0 0.0
        %1616 = vmatpush2.msra.mxu0 0.0
        %1617 = vmatprep.subr.mxu0 0.0
        %1618 = vmatpush2.msra.mxu0 0.0
        %1619 = vmatprep.subr.mxu0 0.0
        %1620 = vmatpush2.msra.mxu0 0.0
        %1621 = vmatprep.subr.mxu0 0.0
        %1622 = vmatpush2.msra.mxu0 0.0
        %1623 = vmatprep.subr.mxu0 0.0
        %1624 = vmatpush2.msra.mxu0 0.0
        %1625 = vmatprep.subr.mxu0 0.0
        %1626 = vmatpush2.msra.mxu0 0.0
        %1627 = vmatprep.subr.mxu0 0.0
        %1628 = vmatpush2.msra.mxu0 0.0
        %1629 = vmatprep.subr.mxu0 0.0
        %1630 = vmatpush2.msra.mxu0 0.0
        %1631 = vmatprep.subr.mxu0 0.0
        %1632 = vmatpush2.msra.mxu0 0.0
        %1633 = vmatprep.subr.mxu0 0.0
        %1634 = vmatpush2.msra.mxu0 0.0
        %1635 = vmatprep.subr.mxu0 0.0
        %1636 = vmatpush2.msra.mxu0 0.0
        %1637 = vmatprep.subr.mxu0 0.0
        %1638 = vmatpush2.msra.mxu0 0.0
        %1639 = vmatprep.subr.mxu0 0.0
        %1640 = vmatpush2.msra.mxu0 0.0
        %1641 = vmatprep.subr.mxu0 0.0
        %1642 = vmatpush2.msra.mxu0 0.0
        %1643 = vmatprep.subr.mxu0 0.0
        %1644 = vmatpush2.msra.mxu0 0.0
        %1645 = vmatprep.subr.mxu0 0.0
        %1646 = vmatpush2.msra.mxu0 0.0
        %1647 = vmatprep.mubr.f32.mxu0 0.0
        %1648 = vmatmul.mubr.f32.gmra.mxu0 %v1575
        %v1649 = vpop.f32.mrf.mxu0
        %v1650 = vadd.f32 %v1561, %v1649
        %v1651 = vpop.f32.mrf.mxu0
        %1652 = vmatprep.mubr.f32.mxu0 0.0
        %1653 = vmatmul.mubr.f32.gmra.mxu0 %v1578
        %v1654 = vpop.f32.mrf.mxu0
        %v1655 = vadd.f32 %v1566, %v1654
        %v1656 = vpop.f32.mrf.mxu0
        %1657 = vmatprep.mubr.f32.mxu0 0.0
        %1658 = vmatmul.mubr.f32.gmra.mxu0 %v1581
        %v1659 = vpop.f32.mrf.mxu0
        %v1660 = vadd.f32 %v1571, %v1659
        %v1661 = vpop.f32.mrf.mxu0
        %1662 = vdwg.mxu0
        %s1663 = scalar_lea.vmem %s9, 48
        %v1664 = vld [vmem:[%s1663] sm:$0xff]
        %v1665 = vld [vmem:[%s1663 + $0x8] sm:$0xff]
        %v1666 = vld [vmem:[%s1663 + $0x10] sm:$0xff]
        %v1668 = vsel %vm1484, %v1664, 0
        %v1671 = vsel %vm1484, %v1665, 0
        %v1674 = vsel %vm1484, %v1666, 0
        %1676 = vmatprep.subr.mxu0 0.0
        %1677 = vmatpush1.msra.mxu0 0.0
        %1678 = vmatprep.subr.mxu0 0.0
        %1679 = vmatpush1.msra.mxu0 0.0
        %1680 = vmatprep.subr.mxu0 0.0
        %1681 = vmatpush1.msra.mxu0 0.0
        %1682 = vmatprep.subr.mxu0 0.0
        %1683 = vmatpush1.msra.mxu0 0.0
        %1684 = vmatprep.subr.mxu0 0.0
        %1685 = vmatpush1.msra.mxu0 0.0
        %1686 = vmatprep.subr.mxu0 0.0
        %1687 = vmatpush1.msra.mxu0 0.0
        %1688 = vmatprep.subr.mxu0 0.0
        %1689 = vmatpush1.msra.mxu0 0.0
        %1690 = vmatprep.subr.mxu0 0.0
        %1691 = vmatpush1.msra.mxu0 0.0
        %1692 = vmatprep.subr.mxu0 0.0
        %1693 = vmatpush1.msra.mxu0 0.0
        %1694 = vmatprep.subr.mxu0 0.0
        %1695 = vmatpush1.msra.mxu0 0.0
        %1696 = vmatprep.subr.mxu0 0.0
        %1697 = vmatpush1.msra.mxu0 0.0
        %1698 = vmatprep.subr.mxu0 0.0
        %1699 = vmatpush1.msra.mxu0 0.0
        %1700 = vmatprep.subr.mxu0 0.0
        %1701 = vmatpush1.msra.mxu0 0.0
        %1702 = vmatprep.subr.mxu0 0.0
        %1703 = vmatpush1.msra.mxu0 0.0
        %1704 = vmatprep.subr.mxu0 0.0
        %1705 = vmatpush1.msra.mxu0 %v1474
        %1706 = vmatprep.subr.mxu0 0.0
        %1707 = vmatpush1.msra.mxu0 %v1469
        %1708 = vmatprep.subr.mxu0 0.0
        %1709 = vmatpush2.msra.mxu0 0.0
        %1710 = vmatprep.subr.mxu0 0.0
        %1711 = vmatpush2.msra.mxu0 0.0
        %1712 = vmatprep.subr.mxu0 0.0
        %1713 = vmatpush2.msra.mxu0 0.0
        %1714 = vmatprep.subr.mxu0 0.0
        %1715 = vmatpush2.msra.mxu0 0.0
        %1716 = vmatprep.subr.mxu0 0.0
        %1717 = vmatpush2.msra.mxu0 0.0
        %1718 = vmatprep.subr.mxu0 0.0
        %1719 = vmatpush2.msra.mxu0 0.0
        %1720 = vmatprep.subr.mxu0 0.0
        %1721 = vmatpush2.msra.mxu0 0.0
        %1722 = vmatprep.subr.mxu0 0.0
        %1723 = vmatpush2.msra.mxu0 0.0
        %1724 = vmatprep.subr.mxu0 0.0
        %1725 = vmatpush2.msra.mxu0 0.0
        %1726 = vmatprep.subr.mxu0 0.0
        %1727 = vmatpush2.msra.mxu0 0.0
        %1728 = vmatprep.subr.mxu0 0.0
        %1729 = vmatpush2.msra.mxu0 0.0
        %1730 = vmatprep.subr.mxu0 0.0
        %1731 = vmatpush2.msra.mxu0 0.0
        %1732 = vmatprep.subr.mxu0 0.0
        %1733 = vmatpush2.msra.mxu0 0.0
        %1734 = vmatprep.subr.mxu0 0.0
        %1735 = vmatpush2.msra.mxu0 0.0
        %1736 = vmatprep.subr.mxu0 0.0
        %1737 = vmatpush2.msra.mxu0 0.0
        %1738 = vmatprep.subr.mxu0 0.0
        %1739 = vmatpush2.msra.mxu0 0.0
        %1740 = vmatprep.mubr.f32.mxu0 0.0
        %1741 = vmatmul.mubr.f32.gmra.mxu0 %v1668
        %v1742 = vpop.f32.mrf.mxu0
        %v1743 = vadd.f32 0.0, %v1742
        %v1744 = vpop.f32.mrf.mxu0
        %1745 = vmatprep.mubr.f32.mxu0 0.0
        %1746 = vmatmul.mubr.f32.gmra.mxu0 %v1671
        %v1747 = vpop.f32.mrf.mxu0
        %v1748 = vadd.f32 0.0, %v1747
        %v1749 = vpop.f32.mrf.mxu0
        %1750 = vmatprep.mubr.f32.mxu0 0.0
        %1751 = vmatmul.mubr.f32.gmra.mxu0 %v1674
        %v1752 = vpop.f32.mrf.mxu0
        %v1753 = vadd.f32 0.0, %v1752
        %v1754 = vpop.f32.mrf.mxu0
        %1755 = vdwg.mxu0
        %v1756 = vadd.f32 %v1650, %v1743
        %v1757 = vadd.f32 %v1655, %v1748
        %v1758 = vadd.f32 %v1660, %v1753
        %v1759 = vld [vmem:[%s8] sm:$0x1]
        %v1761 = vlaneseq
        %v1762 = vshrl.u32 %v1761, 7
        %v1763 = vsub.s32 0, %v1762
        %v1764 = vrot.slane %v1759, %v1763
        %v1766 = vadd.f32 %v1756, %v1764
        %v1767 = vadd.f32 %v1757, %v1764
        %v1768 = vadd.f32 %v1758, %v1764
        %v1769 = vmax.f32 %v1766, 0.0
        %v1770 = vmax.f32 %v1767, 0.0
        %v1771 = vmax.f32 %v1768, 0.0
        %1772 = vst [vmem:[%s394] sm:$0xff] %v1769
        %1773 = vst [vmem:[%s394 + $0x8] sm:$0xff] %v1770
        %1774 = vst [vmem:[%s394 + $0x10] sm:$0xff] %v1771
        %s1775 = sand.u32 %s249, 1
        %s1776 = scalar_lea.sflag [#allocation4], %s1775
        %s1777 = sand.u32 %s249, 1
        %s1778 = smul.addr %s1777, 24
        %s1779 = scalar_lea.vmem [#allocation8], %s1778
        // Predicated region
        $region73: #{tpu_custom_call.1} parent=59 // pred_check
          %p1780 = pneg %p259
        $region74: #{tpu_custom_call.1} parent=59 // pred_check_branch
          %1782 = sbr.rel (%p1780) target = $region76
        $region75: #{tpu_custom_call.1} parent=59 // pred_region
          %s1784 = ssub.s32 384, 384
          %1785 = vsyncadd %s1776, %s1784
          %s1786 = smul.addr %s26, 3
          %s1787 = smul.addr %s1786, 128
          %s1788 = scalar_lea.hbm %s10, %s1787
          %s1789 = sshll.u32 %s1779, 4
          %s1790 = int_to_ptr.vmem [resolvable:$true] %s1789
          %1795 = dma.vmem_to_hbm [thread:$0]  %s1790, 384, %s1788, %s1776, 128, 128, 8
        $region76: #{tpu_custom_call.1} parent=59 // pred_fallthru
          _
      $region60: #{tpu_custom_call.1} parent=5 // pred_fallthru
        _
      %p1796 = scmp.le.s32.totalorder 2, %s21
      // Predicated region
      $region77: #{tpu_custom_call.1} parent=5 // pred_check
        %p1797 = pneg %p1796
      $region78: #{tpu_custom_call.1} parent=5 // pred_check_branch
        %1799 = sbr.rel (%p1797) target = $region80
      $region79: #{tpu_custom_call.1} parent=5 // pred_region
        %s1800 = ssub.s32 %s21, 2
        // Predicated region
        $region81: #{tpu_custom_call.1} parent=79 // pred_check
          %p1801 = pneg %p265
        $region82: #{tpu_custom_call.1} parent=79 // pred_check_branch
          %1803 = sbr.rel (%p1801) target = $region84
        $region83: #{tpu_custom_call.1} parent=79 // pred_region
          %s1804 = sand.u32 %s250, 1
          %s1805 = scalar_lea.sflag [#allocation4], %s1804
          %s1806 = sand.u32 %s250, 1
          %s1807 = smul.addr %s1806, 24
          %s1808 = scalar_lea.vmem [#allocation8], %s1807
          %1809 = dma.done %s1805, 384
        $region84: #{tpu_custom_call.1} parent=79 // pred_fallthru
          _
      $region80: #{tpu_custom_call.1} parent=5 // pred_fallthru
        _
    $region6: #{tpu_custom_call.1} parent=1 // loop_footer
      %s25 = sadd.s32 1, %s21
    $region7: #{tpu_custom_call.1} parent=1 // loop_footer_branch
      %20 = sbr.rel target = $region3
    $region8: #{tpu_custom_call.1} parent=1 // loop_exit
      _
    %1810 = vsyncpa [#allocation3], 1
    %s1811 = scalar_lea.sflag [#allocation3], 1
    %1812 = vsyncpa %s1811, 1
    %1813 = vsyncpa [#allocation6], 1
    %1814 = vsyncpa [#allocation4], 1
    %s1815 = scalar_lea.sflag [#allocation4], 1
    %1816 = vsyncpa %s1815, 1

</llo_original>
